<compile_context>
chip_gen: v5e
topology: v5e:2x2
jax: 0.10.0
libtpu: 0.0.40
codegen_flags: <defaults>
</compile_context>

<pallas_src>
import functools
import math

import jax
import jax.numpy as jnp
import numpy as np
from jax.experimental import pallas as pl
from jax.experimental.pallas import tpu as pltpu

LN_EPS = 1e-5        # torch nn.LayerNorm default
_NEG_INF = -1e30     # additive mask value (exp underflows to exactly 0 in f32)

_VSPEC = pl.BlockSpec(memory_space=pltpu.MemorySpace.VMEM)


# ----------------------------- in-kernel helpers -----------------------------

def _layer_norm(y, gamma, beta):
    mean = jnp.mean(y, axis=-1, keepdims=True)
    var = jnp.mean((y - mean) ** 2, axis=-1, keepdims=True)
    return (y - mean) * jax.lax.rsqrt(var + LN_EPS) * gamma + beta


def _mha_block(x, kv_bf, add_mask, pad, params, attn_ref, *,
               n_head, d_k, d_v, inv_temp):
    """Multi-head attention + residual + LayerNorm + non_pad mask.

    x:        (N, Dm) f32 resident activation (N = B*Lq); also the residual.
    kv_bf:    (M, Dm) bf16 key/value source (M = B*Lk).
    add_mask: (N, M) f32 block-diagonal additive mask (0 attend / -1e30 masked).
    params:   head-fused weights: wq/wk (Dm,H*Dk) bf16, wv (Dm,H*Dv) bf16,
              wo (H*Dv,Dm) bf16, biases / LN params f32.
    attn_ref: (H, N, M) f32 output ref for the (block-diagonal) probabilities.
    """
    wq_ref, bq_ref, wk_ref, bk_ref, wv_ref, bv_ref, wo_ref, bo_ref, g_ref, b_ref = params

    x_bf = x.astype(jnp.bfloat16)
    # Head-fused projections: one matmul each (f32 accumulation, f32 bias add).
    q = jnp.dot(x_bf, wq_ref[...], preferred_element_type=jnp.float32) + bq_ref[...]
    q = q * inv_temp                       # scale on (N, H*Dk) instead of (N, M)
    k = jnp.dot(kv_bf, wk_ref[...], preferred_element_type=jnp.float32) + bk_ref[...]
    v = jnp.dot(kv_bf, wv_ref[...], preferred_element_type=jnp.float32) + bv_ref[...]
    q = q.astype(jnp.bfloat16)
    k = k.astype(jnp.bfloat16)
    v = v.astype(jnp.bfloat16)

    heads = []
    for h in range(n_head):                # tiny H -> fully unrolled
        qh = q[:, h * d_k:(h + 1) * d_k]
        kh = k[:, h * d_k:(h + 1) * d_k]
        vh = v[:, h * d_v:(h + 1) * d_v]
        # scores over ALL rows at once; cross-batch entries killed by add_mask.
        s = jax.lax.dot_general(qh, kh, (((1,), (1,)), ((), ())),
                                preferred_element_type=jnp.float32)
        s = s + add_mask
        m = jnp.max(s, axis=-1, keepdims=True)
        e = jnp.exp(s - m)                 # masked entries -> exactly 0.0
        p = e * pl.reciprocal(jnp.sum(e, axis=-1, keepdims=True), approx=True)
        attn_ref[h] = p                    # one (N, M) store per head
        heads.append(jnp.dot(p.astype(jnp.bfloat16), vh,
                             preferred_element_type=jnp.float32))

    # Concatenated heads -> single output projection matmul.
    o = jnp.concatenate(heads, axis=-1).astype(jnp.bfloat16)        # (N, H*Dv)
    y = jnp.dot(o, wo_ref[...], preferred_element_type=jnp.float32) \
        + bo_ref[...] + x                                           # fc bias + residual
    return _layer_norm(y, g_ref[...], b_ref[...]) * pad


def _ffn_block(x, pad, params):
    """Position-wise FFN (Conv1d k=1 == Linear) + residual + LayerNorm + mask."""
    w1_ref, b1_ref, w2_ref, b2_ref, g_ref, b_ref = params
    h = jnp.dot(x.astype(jnp.bfloat16), w1_ref[...],
                preferred_element_type=jnp.float32) + b1_ref[...]
    h = jnp.maximum(h, 0.0)                                         # ReLU in f32
    y = jnp.dot(h.astype(jnp.bfloat16), w2_ref[...],
                preferred_element_type=jnp.float32) + b2_ref[...] + x
    return _layer_norm(y, g_ref[...], b_ref[...]) * pad


def _decoder_layer_kernel(*refs, n_head, d_k, d_v, inv_temp):
    (dec_ref, enc_ref, pad_ref, slf_mask_ref, enc_mask_ref) = refs[:5]
    slf_params = refs[5:15]
    enc_params = refs[15:25]
    ffn_params = refs[25:31]
    out_ref, slf_attn_ref, enc_attn_ref = refs[31:]

    pad = pad_ref[...]                     # (N, 1) f32
    x = dec_ref[...]                       # (N, Dm) f32 resident activation
    enc_bf = enc_ref[...]                  # (M, Dm) bf16

    kw = dict(n_head=n_head, d_k=d_k, d_v=d_v, inv_temp=inv_temp)
    # 1) masked self-attention
    x = _mha_block(x, x.astype(jnp.bfloat16), slf_mask_ref[...], pad,
                   slf_params, slf_attn_ref, **kw)
    # 2) encoder-decoder attention
    x = _mha_block(x, enc_bf, enc_mask_ref[...], pad,
                   enc_params, enc_attn_ref, **kw)
    # 3) position-wise FFN
    out_ref[...] = _ffn_block(x, pad, ffn_params)


# ----------------------------- wrapper (layout plumbing) -----------------------------

def _pack_mha_params(p):
    """PyTorch-layout per-head params -> head-fused bf16 weights / f32 biases."""
    wq, bq, wk, bk, wv, bv, wo, bo, g, beta = p
    H, Dm, Dk = wq.shape
    Dv = wv.shape[2]
    bf = lambda w: w.astype(jnp.bfloat16)
    wq_f = bf(jnp.transpose(wq, (1, 0, 2)).reshape(Dm, H * Dk))
    wk_f = bf(jnp.transpose(wk, (1, 0, 2)).reshape(Dm, H * Dk))
    wv_f = bf(jnp.transpose(wv, (1, 0, 2)).reshape(Dm, H * Dv))
    wo_f = bf(wo.reshape(H * Dv, Dm))
    return (wq_f, bq.reshape(1, H * Dk), wk_f, bk.reshape(1, H * Dk),
            wv_f, bv.reshape(1, H * Dv), wo_f, bo, g, beta)


def _pack_ffn_params(p):
    w1, b1, w2, b2, g, beta = p
    return (w1.astype(jnp.bfloat16), b1, w2.astype(jnp.bfloat16), b2, g, beta)


def _blockdiag_additive_mask(attn_mask):
    """(B, Lq, Lk) {0,1} mask (1 = masked) -> (B*Lq, B*Lk) additive mask:
    0 where attention is allowed, -1e30 on masked and cross-batch entries."""
    B, Lq, Lk = attn_mask.shape
    add = jnp.full((B * Lq, B * Lk), _NEG_INF, jnp.float32)
    for b in range(B):
        add = add.at[b * Lq:(b + 1) * Lq, b * Lk:(b + 1) * Lk].set(
            jnp.where(attn_mask[b] > 0.5, _NEG_INF, 0.0))
    return add


def _extract_diag_blocks(attn_raw, B, Lq, Lk):
    """(H, B*Lq, B*Lk) block-diagonal probs -> (H*B, Lq, Lk), head-major (PyTorch)."""
    H = attn_raw.shape[0]
    a = attn_raw.reshape(H, B, Lq, B, Lk)
    blocks = [a[:, b, :, b, :] for b in range(B)]       # each (H, Lq, Lk)
    return jnp.stack(blocks, axis=1).reshape(H * B, Lq, Lk)


@functools.partial(jax.jit, static_argnums=(8, 9, 10))
def decoder_layer_forward(dec_input, enc_output, non_pad_mask,
                          slf_attn_mask, dec_enc_attn_mask,
                          slf_p, enc_p, ffn_p, n_head, d_k, d_v):
    B, Lq, Dm = dec_input.shape
    Lk = enc_output.shape[1]
    N, M = B * Lq, B * Lk

    dec_flat = dec_input.reshape(N, Dm)                       # f32 (residual path)
    enc_flat = enc_output.reshape(M, Dm).astype(jnp.bfloat16) # K/V source only
    pad_flat = non_pad_mask.reshape(N, 1)
    slf_add = _blockdiag_additive_mask(slf_attn_mask)         # (N, N)
    enc_add = _blockdiag_additive_mask(dec_enc_attn_mask)     # (N, M)

    slf_kp = _pack_mha_params(slf_p)
    enc_kp = _pack_mha_params(enc_p)
    ffn_kp = _pack_ffn_params(ffn_p)
    n_inputs = 5 + len(slf_kp) + len(enc_kp) + len(ffn_kp)

    kern = functools.partial(_decoder_layer_kernel, n_head=n_head, d_k=d_k,
                             d_v=d_v, inv_temp=1.0 / math.sqrt(d_k))
    out_flat, slf_raw, enc_raw = pl.pallas_call(
        kern,
        out_shape=(jax.ShapeDtypeStruct((N, Dm), jnp.float32),
                   jax.ShapeDtypeStruct((n_head, N, N), jnp.float32),
                   jax.ShapeDtypeStruct((n_head, N, M), jnp.float32)),
        in_specs=[_VSPEC] * n_inputs,
        out_specs=(_VSPEC, _VSPEC, _VSPEC),
    )(dec_flat, enc_flat, pad_flat, slf_add, enc_add, *slf_kp, *enc_kp, *ffn_kp)

    out = out_flat.reshape(B, Lq, Dm)
    dec_slf_attn = _extract_diag_blocks(slf_raw, B, Lq, Lq)
    dec_enc_attn = _extract_diag_blocks(enc_raw, B, Lq, Lk)
    return out, dec_slf_attn, dec_enc_attn


# ----------------------------- pure-JAX reference -----------------------------
# Structurally matches the PyTorch module; matmul operands are rounded to bf16
# (f32 accumulation) to mirror the kernel's MXU precision.

def _q(a):
    return a.astype(jnp.bfloat16).astype(jnp.float32)


def _ref_ln(y, g, b):
    mean = jnp.mean(y, axis=-1, keepdims=True)
    var = jnp.mean((y - mean) ** 2, axis=-1, keepdims=True)
    return (y - mean) / jnp.sqrt(var + LN_EPS) * g + b


def _ref_mha(x, kv, mask, post_mask, p, d_k):
    wq, bq, wk, bk, wv, bv, wo, bo, g, beta = p
    ein = functools.partial(jnp.einsum, precision='highest')
    inv_t = 1.0 / math.sqrt(d_k)
    qh = (ein('bld,hdk->bhlk', _q(x), _q(wq)) + bq[None]) * inv_t
    kh = ein('bld,hdk->bhlk', _q(kv), _q(wk)) + bk[None]
    vh = ein('bld,hdk->bhlk', _q(kv), _q(wv)) + bv[None]
    s = ein('bhqd,bhkd->bhqk', _q(qh), _q(kh))
    s = jnp.where(mask[:, None] > 0.5, -jnp.inf, s)
    attn = jax.nn.softmax(s, axis=-1)
    oh = ein('bhqk,bhkd->bhqd', _q(attn), _q(vh))
    out = ein('bhqd,hdm->bqm', _q(oh), _q(wo)) + bo[0][None, None]
    out = _ref_ln(out + x, g[0], beta[0]) * post_mask
    B, H, Lq, Lk = attn.shape
    return out, jnp.transpose(attn, (1, 0, 2, 3)).reshape(H * B, Lq, Lk)


def _ref_ffn(x, post_mask, p):
    w1, b1, w2, b2, g, beta = p
    h = jax.nn.relu(jnp.dot(_q(x), _q(w1), precision='highest') + b1[0])
    y = jnp.dot(_q(h), _q(w2), precision='highest') + b2[0]
    return _ref_ln(y + x, g[0], beta[0]) * post_mask


def _ref_decoder(dec_input, enc_output, non_pad_mask, slf_mask, enc_mask,
                 slf_p, enc_p, ffn_p, d_k):
    x, a1 = _ref_mha(dec_input, dec_input, slf_mask, non_pad_mask, slf_p, d_k)
    x, a2 = _ref_mha(x, enc_output, enc_mask, non_pad_mask, enc_p, d_k)
    x = _ref_ffn(x, non_pad_mask, ffn_p)
    return x, a1, a2


# ----------------------------- main -----------------------------

if __name__ == "__main__":
    B, Lq, Lk = 2, 8, 8
    d_model, d_inner, n_head, d_k, d_v = 32, 64, 4, 8, 8

    key = jax.random.PRNGKey(0)
    ks = iter(jax.random.split(key, 32))

    def nrm(shape, scale=0.1):
        return (scale * jax.random.normal(next(ks), shape)).astype(jnp.float32)

    def make_mha_params():
        return (nrm((n_head, d_model, d_k)), nrm((n_head, 1, d_k)),   # w_qs, b_qs
                nrm((n_head, d_model, d_k)), nrm((n_head, 1, d_k)),   # w_ks, b_ks
                nrm((n_head, d_model, d_v)), nrm((n_head, 1, d_v)),   # w_vs, b_vs
                nrm((n_head, d_v, d_model)), nrm((1, d_model)),       # fc (per-head slices), fc bias
                jnp.ones((1, d_model), jnp.float32),                  # LayerNorm gamma
                jnp.zeros((1, d_model), jnp.float32))                 # LayerNorm beta

    slf_p = make_mha_params()
    enc_p = make_mha_params()
    ffn_p = (nrm((d_model, d_inner)), nrm((1, d_inner)),              # w_1 (Conv1d k=1)
             nrm((d_inner, d_model)), nrm((1, d_model)),              # w_2 (Conv1d k=1)
             jnp.ones((1, d_model), jnp.float32),
             jnp.zeros((1, d_model), jnp.float32))

    dec_input = nrm((B, Lq, d_model), 1.0)
    enc_output = nrm((B, Lk, d_model), 1.0)
    # non_pad_mask: (B, Lq, 1), 0.0 marks padded decoder positions
    non_pad_mask = jnp.ones((B, Lq, 1), jnp.float32).at[1, Lq - 1, 0].set(0.0)
    # slf_attn_mask: causal mask, 1.0 = masked
    slf_attn_mask = jnp.broadcast_to(
        jnp.triu(jnp.ones((Lq, Lq), jnp.float32), k=1), (B, Lq, Lq))
    # dec_enc_attn_mask: mask last two encoder keys of batch 1
    dec_enc_attn_mask = jnp.zeros((B, Lq, Lk), jnp.float32).at[1, :, Lk - 2:].set(1.0)

    out, slf_attn, enc_attn = decoder_layer_forward(
        dec_input, enc_output, non_pad_mask, slf_attn_mask, dec_enc_attn_mask,
        slf_p, enc_p, ffn_p, n_head, d_k, d_v)
    jax.block_until_ready((out, slf_attn, enc_attn))

    ref_out, ref_slf, ref_enc = _ref_decoder(
        dec_input, enc_output, non_pad_mask, slf_attn_mask, dec_enc_attn_mask,
        slf_p, enc_p, ffn_p, d_k)

    # bf16 matmul precision (+ approx reciprocal) vs the bf16-emulating reference.
    np.testing.assert_allclose(np.asarray(out), np.asarray(ref_out), atol=1e-2, rtol=1e-2)
    np.testing.assert_allclose(np.asarray(slf_attn), np.asarray(ref_slf), atol=1e-2, rtol=1e-2)
    np.testing.assert_allclose(np.asarray(enc_attn), np.asarray(ref_enc), atol=1e-2, rtol=1e-2)

    print("KERNEL_OK")
</pallas_src>

<mosaic_0001>
module attributes {stable_mosaic.version = 11 : i64} {
  func.func @_decoder_layer_kernel(%arg0: memref<16x32xf32, #tpu.memory_space<vmem>>, %arg1: memref<16x32xbf16, #tpu.memory_space<vmem>>, %arg2: memref<16x1xf32, #tpu.memory_space<vmem>>, %arg3: memref<16x16xf32, #tpu.memory_space<vmem>>, %arg4: memref<16x16xf32, #tpu.memory_space<vmem>>, %arg5: memref<32x32xbf16, #tpu.memory_space<vmem>>, %arg6: memref<1x32xf32, #tpu.memory_space<vmem>>, %arg7: memref<32x32xbf16, #tpu.memory_space<vmem>>, %arg8: memref<1x32xf32, #tpu.memory_space<vmem>>, %arg9: memref<32x32xbf16, #tpu.memory_space<vmem>>, %arg10: memref<1x32xf32, #tpu.memory_space<vmem>>, %arg11: memref<32x32xbf16, #tpu.memory_space<vmem>>, %arg12: memref<1x32xf32, #tpu.memory_space<vmem>>, %arg13: memref<1x32xf32, #tpu.memory_space<vmem>>, %arg14: memref<1x32xf32, #tpu.memory_space<vmem>>, %arg15: memref<32x32xbf16, #tpu.memory_space<vmem>>, %arg16: memref<1x32xf32, #tpu.memory_space<vmem>>, %arg17: memref<32x32xbf16, #tpu.memory_space<vmem>>, %arg18: memref<1x32xf32, #tpu.memory_space<vmem>>, %arg19: memref<32x32xbf16, #tpu.memory_space<vmem>>, %arg20: memref<1x32xf32, #tpu.memory_space<vmem>>, %arg21: memref<32x32xbf16, #tpu.memory_space<vmem>>, %arg22: memref<1x32xf32, #tpu.memory_space<vmem>>, %arg23: memref<1x32xf32, #tpu.memory_space<vmem>>, %arg24: memref<1x32xf32, #tpu.memory_space<vmem>>, %arg25: memref<32x64xbf16, #tpu.memory_space<vmem>>, %arg26: memref<1x64xf32, #tpu.memory_space<vmem>>, %arg27: memref<64x32xbf16, #tpu.memory_space<vmem>>, %arg28: memref<1x32xf32, #tpu.memory_space<vmem>>, %arg29: memref<1x32xf32, #tpu.memory_space<vmem>>, %arg30: memref<1x32xf32, #tpu.memory_space<vmem>>, %arg31: memref<16x32xf32, #tpu.memory_space<vmem>>, %arg32: memref<4x16x16xf32, #tpu.memory_space<vmem>>, %arg33: memref<4x16x16xf32, #tpu.memory_space<vmem>>) attributes {dimension_semantics = [], scalar_prefetch = 0 : i64, scratch_operands = 0 : i64, tpu.core_type = #tpu.core_type<tc>} {
    %c0 = arith.constant 0 : index
    %c0_0 = arith.constant 0 : index
    %0 = vector.load %arg2[%c0, %c0_0] : memref<16x1xf32, #tpu.memory_space<vmem>>, vector<16x1xf32>
    %c0_1 = arith.constant 0 : index
    %c0_2 = arith.constant 0 : index
    %1 = vector.load %arg0[%c0_1, %c0_2] : memref<16x32xf32, #tpu.memory_space<vmem>>, vector<16x32xf32>
    %c0_3 = arith.constant 0 : index
    %c0_4 = arith.constant 0 : index
    %2 = vector.load %arg1[%c0_3, %c0_4] : memref<16x32xbf16, #tpu.memory_space<vmem>>, vector<16x32xbf16>
    %3 = arith.truncf %1 : vector<16x32xf32> to vector<16x32xbf16>
    %c0_5 = arith.constant 0 : index
    %c0_6 = arith.constant 0 : index
    %4 = vector.load %arg3[%c0_5, %c0_6] : memref<16x16xf32, #tpu.memory_space<vmem>>, vector<16x16xf32>
    %5 = arith.truncf %1 : vector<16x32xf32> to vector<16x32xbf16>
    %c0_7 = arith.constant 0 : index
    %c0_8 = arith.constant 0 : index
    %6 = vector.load %arg5[%c0_7, %c0_8] : memref<32x32xbf16, #tpu.memory_space<vmem>>, vector<32x32xbf16>
    %cst = arith.constant dense<0.000000e+00> : vector<16x32xf32>
    %7 = tpu.matmul %5, %6, %cst {dimension_numbers = #tpu.dot_dimension_numbers<[1], [0], [0], [1], [0, 0, 1, 1], [], []>} : vector<16x32xbf16>, vector<32x32xbf16>, vector<16x32xf32> -> vector<16x32xf32>
    %c0_9 = arith.constant 0 : index
    %c0_10 = arith.constant 0 : index
    %8 = vector.load %arg6[%c0_9, %c0_10] : memref<1x32xf32, #tpu.memory_space<vmem>>, vector<1x32xf32>
    %9 = vector.broadcast %8 : vector<1x32xf32> to vector<16x32xf32>
    %10 = arith.addf %7, %9 : vector<16x32xf32>
    %cst_11 = arith.constant 0.353553385 : f32
    %11 = vector.broadcast %cst_11 : f32 to vector<16x32xf32>
    %12 = arith.mulf %10, %11 : vector<16x32xf32>
    %c0_12 = arith.constant 0 : index
    %c0_13 = arith.constant 0 : index
    %13 = vector.load %arg7[%c0_12, %c0_13] : memref<32x32xbf16, #tpu.memory_space<vmem>>, vector<32x32xbf16>
    %cst_14 = arith.constant dense<0.000000e+00> : vector<16x32xf32>
    %14 = tpu.matmul %3, %13, %cst_14 {dimension_numbers = #tpu.dot_dimension_numbers<[1], [0], [0], [1], [0, 0, 1, 1], [], []>} : vector<16x32xbf16>, vector<32x32xbf16>, vector<16x32xf32> -> vector<16x32xf32>
    %c0_15 = arith.constant 0 : index
    %c0_16 = arith.constant 0 : index
    %15 = vector.load %arg8[%c0_15, %c0_16] : memref<1x32xf32, #tpu.memory_space<vmem>>, vector<1x32xf32>
    %16 = vector.broadcast %15 : vector<1x32xf32> to vector<16x32xf32>
    %17 = arith.addf %14, %16 : vector<16x32xf32>
    %c0_17 = arith.constant 0 : index
    %c0_18 = arith.constant 0 : index
    %18 = vector.load %arg9[%c0_17, %c0_18] : memref<32x32xbf16, #tpu.memory_space<vmem>>, vector<32x32xbf16>
    %cst_19 = arith.constant dense<0.000000e+00> : vector<16x32xf32>
    %19 = tpu.matmul %3, %18, %cst_19 {dimension_numbers = #tpu.dot_dimension_numbers<[1], [0], [0], [1], [0, 0, 1, 1], [], []>} : vector<16x32xbf16>, vector<32x32xbf16>, vector<16x32xf32> -> vector<16x32xf32>
    %c0_20 = arith.constant 0 : index
    %c0_21 = arith.constant 0 : index
    %20 = vector.load %arg10[%c0_20, %c0_21] : memref<1x32xf32, #tpu.memory_space<vmem>>, vector<1x32xf32>
    %21 = vector.broadcast %20 : vector<1x32xf32> to vector<16x32xf32>
    %22 = arith.addf %19, %21 : vector<16x32xf32>
    %23 = arith.truncf %12 : vector<16x32xf32> to vector<16x32xbf16>
    %24 = arith.truncf %17 : vector<16x32xf32> to vector<16x32xbf16>
    %25 = arith.truncf %22 : vector<16x32xf32> to vector<16x32xbf16>
    %26 = vector.extract_strided_slice %23 {offsets = [0, 0], sizes = [16, 8], strides = [1, 1]} : vector<16x32xbf16> to vector<16x8xbf16>
    %27 = vector.extract_strided_slice %24 {offsets = [0, 0], sizes = [16, 8], strides = [1, 1]} : vector<16x32xbf16> to vector<16x8xbf16>
    %28 = vector.extract_strided_slice %25 {offsets = [0, 0], sizes = [16, 8], strides = [1, 1]} : vector<16x32xbf16> to vector<16x8xbf16>
    %cst_22 = arith.constant dense<0.000000e+00> : vector<16x16xf32>
    %29 = tpu.matmul %26, %27, %cst_22 {dimension_numbers = #tpu.dot_dimension_numbers<[1], [1], [0], [0], [0, 0, 1, 0], [], []>} : vector<16x8xbf16>, vector<16x8xbf16>, vector<16x16xf32> -> vector<16x16xf32>
    %30 = arith.addf %29, %4 : vector<16x16xf32>
    %cst_23 = arith.constant dense<0xFF800000> : vector<16xf32>
    %31 = vector.multi_reduction <maximumf>, %30, %cst_23 [1] : vector<16x16xf32> to vector<16xf32>
    %32 = vector.shape_cast %31 : vector<16xf32> to vector<16x1xf32>
    %33 = vector.broadcast %32 : vector<16x1xf32> to vector<16x16xf32>
    %34 = arith.subf %30, %33 : vector<16x16xf32>
    %35 = math.exp %34 : vector<16x16xf32>
    %cst_24 = arith.constant dense<0.000000e+00> : vector<16xf32>
    %36 = vector.multi_reduction <add>, %35, %cst_24 [1] : vector<16x16xf32> to vector<16xf32>
    %37 = vector.shape_cast %36 : vector<16xf32> to vector<16x1xf32>
    %38 = tpu.reciprocal %37 {approx = true} : vector<16x1xf32> -> vector<16x1xf32>
    %39 = vector.broadcast %38 : vector<16x1xf32> to vector<16x16xf32>
    %40 = arith.mulf %35, %39 : vector<16x16xf32>
    %c0_25 = arith.constant 0 : index
    %c0_26 = arith.constant 0 : index
    %c0_27 = arith.constant 0 : index
    %41 = vector.load %arg32[%c0_25, %c0_26, %c0_27] : memref<4x16x16xf32, #tpu.memory_space<vmem>>, vector<1x16x16xf32>
    %42 = vector.shape_cast %41 : vector<1x16x16xf32> to vector<16x16xf32>
    %43 = vector.shape_cast %40 : vector<16x16xf32> to vector<1x16x16xf32>
    tpu.vector_store %arg32[%c0_25, %c0_26, %c0_27], %43 {strides = array<i32>} : memref<4x16x16xf32, #tpu.memory_space<vmem>>, vector<1x16x16xf32>,
    %44 = arith.truncf %40 : vector<16x16xf32> to vector<16x16xbf16>
    %cst_28 = arith.constant dense<0.000000e+00> : vector<16x8xf32>
    %45 = tpu.matmul %44, %28, %cst_28 {dimension_numbers = #tpu.dot_dimension_numbers<[1], [0], [0], [1], [0, 0, 1, 1], [], []>} : vector<16x16xbf16>, vector<16x8xbf16>, vector<16x8xf32> -> vector<16x8xf32>
    %46 = vector.extract_strided_slice %23 {offsets = [0, 8], sizes = [16, 8], strides = [1, 1]} : vector<16x32xbf16> to vector<16x8xbf16>
    %47 = vector.extract_strided_slice %24 {offsets = [0, 8], sizes = [16, 8], strides = [1, 1]} : vector<16x32xbf16> to vector<16x8xbf16>
    %48 = vector.extract_strided_slice %25 {offsets = [0, 8], sizes = [16, 8], strides = [1, 1]} : vector<16x32xbf16> to vector<16x8xbf16>
    %cst_29 = arith.constant dense<0.000000e+00> : vector<16x16xf32>
    %49 = tpu.matmul %46, %47, %cst_29 {dimension_numbers = #tpu.dot_dimension_numbers<[1], [1], [0], [0], [0, 0, 1, 0], [], []>} : vector<16x8xbf16>, vector<16x8xbf16>, vector<16x16xf32> -> vector<16x16xf32>
    %50 = arith.addf %49, %4 : vector<16x16xf32>
    %cst_30 = arith.constant dense<0xFF800000> : vector<16xf32>
    %51 = vector.multi_reduction <maximumf>, %50, %cst_30 [1] : vector<16x16xf32> to vector<16xf32>
    %52 = vector.shape_cast %51 : vector<16xf32> to vector<16x1xf32>
    %53 = vector.broadcast %52 : vector<16x1xf32> to vector<16x16xf32>
    %54 = arith.subf %50, %53 : vector<16x16xf32>
    %55 = math.exp %54 : vector<16x16xf32>
    %cst_31 = arith.constant dense<0.000000e+00> : vector<16xf32>
    %56 = vector.multi_reduction <add>, %55, %cst_31 [1] : vector<16x16xf32> to vector<16xf32>
    %57 = vector.shape_cast %56 : vector<16xf32> to vector<16x1xf32>
    %58 = tpu.reciprocal %57 {approx = true} : vector<16x1xf32> -> vector<16x1xf32>
    %59 = vector.broadcast %58 : vector<16x1xf32> to vector<16x16xf32>
    %60 = arith.mulf %55, %59 : vector<16x16xf32>
    %c1 = arith.constant 1 : index
    %c0_32 = arith.constant 0 : index
    %c0_33 = arith.constant 0 : index
    %61 = vector.load %arg32[%c1, %c0_32, %c0_33] : memref<4x16x16xf32, #tpu.memory_space<vmem>>, vector<1x16x16xf32>
    %62 = vector.shape_cast %61 : vector<1x16x16xf32> to vector<16x16xf32>
    %63 = vector.shape_cast %60 : vector<16x16xf32> to vector<1x16x16xf32>
    tpu.vector_store %arg32[%c1, %c0_32, %c0_33], %63 {strides = array<i32>} : memref<4x16x16xf32, #tpu.memory_space<vmem>>, vector<1x16x16xf32>,
    %64 = arith.truncf %60 : vector<16x16xf32> to vector<16x16xbf16>
    %cst_34 = arith.constant dense<0.000000e+00> : vector<16x8xf32>
    %65 = tpu.matmul %64, %48, %cst_34 {dimension_numbers = #tpu.dot_dimension_numbers<[1], [0], [0], [1], [0, 0, 1, 1], [], []>} : vector<16x16xbf16>, vector<16x8xbf16>, vector<16x8xf32> -> vector<16x8xf32>
    %66 = vector.extract_strided_slice %23 {offsets = [0, 16], sizes = [16, 8], strides = [1, 1]} : vector<16x32xbf16> to vector<16x8xbf16>
    %67 = vector.extract_strided_slice %24 {offsets = [0, 16], sizes = [16, 8], strides = [1, 1]} : vector<16x32xbf16> to vector<16x8xbf16>
    %68 = vector.extract_strided_slice %25 {offsets = [0, 16], sizes = [16, 8], strides = [1, 1]} : vector<16x32xbf16> to vector<16x8xbf16>
    %cst_35 = arith.constant dense<0.000000e+00> : vector<16x16xf32>
    %69 = tpu.matmul %66, %67, %cst_35 {dimension_numbers = #tpu.dot_dimension_numbers<[1], [1], [0], [0], [0, 0, 1, 0], [], []>} : vector<16x8xbf16>, vector<16x8xbf16>, vector<16x16xf32> -> vector<16x16xf32>
    %70 = arith.addf %69, %4 : vector<16x16xf32>
    %cst_36 = arith.constant dense<0xFF800000> : vector<16xf32>
    %71 = vector.multi_reduction <maximumf>, %70, %cst_36 [1] : vector<16x16xf32> to vector<16xf32>
    %72 = vector.shape_cast %71 : vector<16xf32> to vector<16x1xf32>
    %73 = vector.broadcast %72 : vector<16x1xf32> to vector<16x16xf32>
    %74 = arith.subf %70, %73 : vector<16x16xf32>
    %75 = math.exp %74 : vector<16x16xf32>
    %cst_37 = arith.constant dense<0.000000e+00> : vector<16xf32>
    %76 = vector.multi_reduction <add>, %75, %cst_37 [1] : vector<16x16xf32> to vector<16xf32>
    %77 = vector.shape_cast %76 : vector<16xf32> to vector<16x1xf32>
    %78 = tpu.reciprocal %77 {approx = true} : vector<16x1xf32> -> vector<16x1xf32>
    %79 = vector.broadcast %78 : vector<16x1xf32> to vector<16x16xf32>
    %80 = arith.mulf %75, %79 : vector<16x16xf32>
    %c2 = arith.constant 2 : index
    %c0_38 = arith.constant 0 : index
    %c0_39 = arith.constant 0 : index
    %81 = vector.load %arg32[%c2, %c0_38, %c0_39] : memref<4x16x16xf32, #tpu.memory_space<vmem>>, vector<1x16x16xf32>
    %82 = vector.shape_cast %81 : vector<1x16x16xf32> to vector<16x16xf32>
    %83 = vector.shape_cast %80 : vector<16x16xf32> to vector<1x16x16xf32>
    tpu.vector_store %arg32[%c2, %c0_38, %c0_39], %83 {strides = array<i32>} : memref<4x16x16xf32, #tpu.memory_space<vmem>>, vector<1x16x16xf32>,
    %84 = arith.truncf %80 : vector<16x16xf32> to vector<16x16xbf16>
    %cst_40 = arith.constant dense<0.000000e+00> : vector<16x8xf32>
    %85 = tpu.matmul %84, %68, %cst_40 {dimension_numbers = #tpu.dot_dimension_numbers<[1], [0], [0], [1], [0, 0, 1, 1], [], []>} : vector<16x16xbf16>, vector<16x8xbf16>, vector<16x8xf32> -> vector<16x8xf32>
    %86 = vector.extract_strided_slice %23 {offsets = [0, 24], sizes = [16, 8], strides = [1, 1]} : vector<16x32xbf16> to vector<16x8xbf16>
    %87 = vector.extract_strided_slice %24 {offsets = [0, 24], sizes = [16, 8], strides = [1, 1]} : vector<16x32xbf16> to vector<16x8xbf16>
    %88 = vector.extract_strided_slice %25 {offsets = [0, 24], sizes = [16, 8], strides = [1, 1]} : vector<16x32xbf16> to vector<16x8xbf16>
    %cst_41 = arith.constant dense<0.000000e+00> : vector<16x16xf32>
    %89 = tpu.matmul %86, %87, %cst_41 {dimension_numbers = #tpu.dot_dimension_numbers<[1], [1], [0], [0], [0, 0, 1, 0], [], []>} : vector<16x8xbf16>, vector<16x8xbf16>, vector<16x16xf32> -> vector<16x16xf32>
    %90 = arith.addf %89, %4 : vector<16x16xf32>
    %cst_42 = arith.constant dense<0xFF800000> : vector<16xf32>
    %91 = vector.multi_reduction <maximumf>, %90, %cst_42 [1] : vector<16x16xf32> to vector<16xf32>
    %92 = vector.shape_cast %91 : vector<16xf32> to vector<16x1xf32>
    %93 = vector.broadcast %92 : vector<16x1xf32> to vector<16x16xf32>
    %94 = arith.subf %90, %93 : vector<16x16xf32>
    %95 = math.exp %94 : vector<16x16xf32>
    %cst_43 = arith.constant dense<0.000000e+00> : vector<16xf32>
    %96 = vector.multi_reduction <add>, %95, %cst_43 [1] : vector<16x16xf32> to vector<16xf32>
    %97 = vector.shape_cast %96 : vector<16xf32> to vector<16x1xf32>
    %98 = tpu.reciprocal %97 {approx = true} : vector<16x1xf32> -> vector<16x1xf32>
    %99 = vector.broadcast %98 : vector<16x1xf32> to vector<16x16xf32>
    %100 = arith.mulf %95, %99 : vector<16x16xf32>
    %c3 = arith.constant 3 : index
    %c0_44 = arith.constant 0 : index
    %c0_45 = arith.constant 0 : index
    %101 = vector.load %arg32[%c3, %c0_44, %c0_45] : memref<4x16x16xf32, #tpu.memory_space<vmem>>, vector<1x16x16xf32>
    %102 = vector.shape_cast %101 : vector<1x16x16xf32> to vector<16x16xf32>
    %103 = vector.shape_cast %100 : vector<16x16xf32> to vector<1x16x16xf32>
    tpu.vector_store %arg32[%c3, %c0_44, %c0_45], %103 {strides = array<i32>} : memref<4x16x16xf32, #tpu.memory_space<vmem>>, vector<1x16x16xf32>,
    %104 = arith.truncf %100 : vector<16x16xf32> to vector<16x16xbf16>
    %cst_46 = arith.constant dense<0.000000e+00> : vector<16x8xf32>
    %105 = tpu.matmul %104, %88, %cst_46 {dimension_numbers = #tpu.dot_dimension_numbers<[1], [0], [0], [1], [0, 0, 1, 1], [], []>} : vector<16x16xbf16>, vector<16x8xbf16>, vector<16x8xf32> -> vector<16x8xf32>
    %106 = tpu.concatenate %45, %65, %85, %105 in 1 : vector<16x8xf32>, vector<16x8xf32>, vector<16x8xf32>, vector<16x8xf32> -> vector<16x32xf32>
    %107 = arith.truncf %106 : vector<16x32xf32> to vector<16x32xbf16>
    %c0_47 = arith.constant 0 : index
    %c0_48 = arith.constant 0 : index
    %108 = vector.load %arg11[%c0_47, %c0_48] : memref<32x32xbf16, #tpu.memory_space<vmem>>, vector<32x32xbf16>
    %cst_49 = arith.constant dense<0.000000e+00> : vector<16x32xf32>
    %109 = tpu.matmul %107, %108, %cst_49 {dimension_numbers = #tpu.dot_dimension_numbers<[1], [0], [0], [1], [0, 0, 1, 1], [], []>} : vector<16x32xbf16>, vector<32x32xbf16>, vector<16x32xf32> -> vector<16x32xf32>
    %c0_50 = arith.constant 0 : index
    %c0_51 = arith.constant 0 : index
    %110 = vector.load %arg12[%c0_50, %c0_51] : memref<1x32xf32, #tpu.memory_space<vmem>>, vector<1x32xf32>
    %111 = vector.broadcast %110 : vector<1x32xf32> to vector<16x32xf32>
    %112 = arith.addf %109, %111 : vector<16x32xf32>
    %113 = arith.addf %112, %1 : vector<16x32xf32>
    %c0_52 = arith.constant 0 : index
    %c0_53 = arith.constant 0 : index
    %114 = vector.load %arg13[%c0_52, %c0_53] : memref<1x32xf32, #tpu.memory_space<vmem>>, vector<1x32xf32>
    %c0_54 = arith.constant 0 : index
    %c0_55 = arith.constant 0 : index
    %115 = vector.load %arg14[%c0_54, %c0_55] : memref<1x32xf32, #tpu.memory_space<vmem>>, vector<1x32xf32>
    %cst_56 = arith.constant dense<0.000000e+00> : vector<16xf32>
    %116 = vector.multi_reduction <add>, %113, %cst_56 [1] : vector<16x32xf32> to vector<16xf32>
    %117 = vector.shape_cast %116 : vector<16xf32> to vector<16x1xf32>
    %cst_57 = arith.constant 3.200000e+01 : f32
    %118 = vector.broadcast %cst_57 : f32 to vector<16x1xf32>
    %119 = arith.divf %117, %118 : vector<16x1xf32>
    %120 = vector.broadcast %119 : vector<16x1xf32> to vector<16x32xf32>
    %121 = arith.subf %113, %120 : vector<16x32xf32>
    %122 = arith.mulf %121, %121 : vector<16x32xf32>
    %cst_58 = arith.constant dense<0.000000e+00> : vector<16xf32>
    %123 = vector.multi_reduction <add>, %122, %cst_58 [1] : vector<16x32xf32> to vector<16xf32>
    %124 = vector.shape_cast %123 : vector<16xf32> to vector<16x1xf32>
    %cst_59 = arith.constant 3.200000e+01 : f32
    %125 = vector.broadcast %cst_59 : f32 to vector<16x1xf32>
    %126 = arith.divf %124, %125 : vector<16x1xf32>
    %127 = vector.broadcast %119 : vector<16x1xf32> to vector<16x32xf32>
    %128 = arith.subf %113, %127 : vector<16x32xf32>
    %cst_60 = arith.constant 9.99999974E-6 : f32
    %129 = vector.broadcast %cst_60 : f32 to vector<16x1xf32>
    %130 = arith.addf %126, %129 : vector<16x1xf32>
    %131 = math.rsqrt %130 : vector<16x1xf32>
    %132 = vector.broadcast %131 : vector<16x1xf32> to vector<16x32xf32>
    %133 = arith.mulf %128, %132 : vector<16x32xf32>
    %134 = vector.broadcast %114 : vector<1x32xf32> to vector<16x32xf32>
    %135 = arith.mulf %133, %134 : vector<16x32xf32>
    %136 = vector.broadcast %115 : vector<1x32xf32> to vector<16x32xf32>
    %137 = arith.addf %135, %136 : vector<16x32xf32>
    %138 = vector.broadcast %0 : vector<16x1xf32> to vector<16x32xf32>
    %139 = arith.mulf %137, %138 : vector<16x32xf32>
    %c0_61 = arith.constant 0 : index
    %c0_62 = arith.constant 0 : index
    %140 = vector.load %arg4[%c0_61, %c0_62] : memref<16x16xf32, #tpu.memory_space<vmem>>, vector<16x16xf32>
    %141 = arith.truncf %139 : vector<16x32xf32> to vector<16x32xbf16>
    %c0_63 = arith.constant 0 : index
    %c0_64 = arith.constant 0 : index
    %142 = vector.load %arg15[%c0_63, %c0_64] : memref<32x32xbf16, #tpu.memory_space<vmem>>, vector<32x32xbf16>
    %cst_65 = arith.constant dense<0.000000e+00> : vector<16x32xf32>
    %143 = tpu.matmul %141, %142, %cst_65 {dimension_numbers = #tpu.dot_dimension_numbers<[1], [0], [0], [1], [0, 0, 1, 1], [], []>} : vector<16x32xbf16>, vector<32x32xbf16>, vector<16x32xf32> -> vector<16x32xf32>
    %c0_66 = arith.constant 0 : index
    %c0_67 = arith.constant 0 : index
    %144 = vector.load %arg16[%c0_66, %c0_67] : memref<1x32xf32, #tpu.memory_space<vmem>>, vector<1x32xf32>
    %145 = vector.broadcast %144 : vector<1x32xf32> to vector<16x32xf32>
    %146 = arith.addf %143, %145 : vector<16x32xf32>
    %cst_68 = arith.constant 0.353553385 : f32
    %147 = vector.broadcast %cst_68 : f32 to vector<16x32xf32>
    %148 = arith.mulf %146, %147 : vector<16x32xf32>
    %c0_69 = arith.constant 0 : index
    %c0_70 = arith.constant 0 : index
    %149 = vector.load %arg17[%c0_69, %c0_70] : memref<32x32xbf16, #tpu.memory_space<vmem>>, vector<32x32xbf16>
    %cst_71 = arith.constant dense<0.000000e+00> : vector<16x32xf32>
    %150 = tpu.matmul %2, %149, %cst_71 {dimension_numbers = #tpu.dot_dimension_numbers<[1], [0], [0], [1], [0, 0, 1, 1], [], []>} : vector<16x32xbf16>, vector<32x32xbf16>, vector<16x32xf32> -> vector<16x32xf32>
    %c0_72 = arith.constant 0 : index
    %c0_73 = arith.constant 0 : index
    %151 = vector.load %arg18[%c0_72, %c0_73] : memref<1x32xf32, #tpu.memory_space<vmem>>, vector<1x32xf32>
    %152 = vector.broadcast %151 : vector<1x32xf32> to vector<16x32xf32>
    %153 = arith.addf %150, %152 : vector<16x32xf32>
    %c0_74 = arith.constant 0 : index
    %c0_75 = arith.constant 0 : index
    %154 = vector.load %arg19[%c0_74, %c0_75] : memref<32x32xbf16, #tpu.memory_space<vmem>>, vector<32x32xbf16>
    %cst_76 = arith.constant dense<0.000000e+00> : vector<16x32xf32>
    %155 = tpu.matmul %2, %154, %cst_76 {dimension_numbers = #tpu.dot_dimension_numbers<[1], [0], [0], [1], [0, 0, 1, 1], [], []>} : vector<16x32xbf16>, vector<32x32xbf16>, vector<16x32xf32> -> vector<16x32xf32>
    %c0_77 = arith.constant 0 : index
    %c0_78 = arith.constant 0 : index
    %156 = vector.load %arg20[%c0_77, %c0_78] : memref<1x32xf32, #tpu.memory_space<vmem>>, vector<1x32xf32>
    %157 = vector.broadcast %156 : vector<1x32xf32> to vector<16x32xf32>
    %158 = arith.addf %155, %157 : vector<16x32xf32>
    %159 = arith.truncf %148 : vector<16x32xf32> to vector<16x32xbf16>
    %160 = arith.truncf %153 : vector<16x32xf32> to vector<16x32xbf16>
    %161 = arith.truncf %158 : vector<16x32xf32> to vector<16x32xbf16>
    %162 = vector.extract_strided_slice %159 {offsets = [0, 0], sizes = [16, 8], strides = [1, 1]} : vector<16x32xbf16> to vector<16x8xbf16>
    %163 = vector.extract_strided_slice %160 {offsets = [0, 0], sizes = [16, 8], strides = [1, 1]} : vector<16x32xbf16> to vector<16x8xbf16>
    %164 = vector.extract_strided_slice %161 {offsets = [0, 0], sizes = [16, 8], strides = [1, 1]} : vector<16x32xbf16> to vector<16x8xbf16>
    %cst_79 = arith.constant dense<0.000000e+00> : vector<16x16xf32>
    %165 = tpu.matmul %162, %163, %cst_79 {dimension_numbers = #tpu.dot_dimension_numbers<[1], [1], [0], [0], [0, 0, 1, 0], [], []>} : vector<16x8xbf16>, vector<16x8xbf16>, vector<16x16xf32> -> vector<16x16xf32>
    %166 = arith.addf %165, %140 : vector<16x16xf32>
    %cst_80 = arith.constant dense<0xFF800000> : vector<16xf32>
    %167 = vector.multi_reduction <maximumf>, %166, %cst_80 [1] : vector<16x16xf32> to vector<16xf32>
    %168 = vector.shape_cast %167 : vector<16xf32> to vector<16x1xf32>
    %169 = vector.broadcast %168 : vector<16x1xf32> to vector<16x16xf32>
    %170 = arith.subf %166, %169 : vector<16x16xf32>
    %171 = math.exp %170 : vector<16x16xf32>
    %cst_81 = arith.constant dense<0.000000e+00> : vector<16xf32>
    %172 = vector.multi_reduction <add>, %171, %cst_81 [1] : vector<16x16xf32> to vector<16xf32>
    %173 = vector.shape_cast %172 : vector<16xf32> to vector<16x1xf32>
    %174 = tpu.reciprocal %173 {approx = true} : vector<16x1xf32> -> vector<16x1xf32>
    %175 = vector.broadcast %174 : vector<16x1xf32> to vector<16x16xf32>
    %176 = arith.mulf %171, %175 : vector<16x16xf32>
    %c0_82 = arith.constant 0 : index
    %c0_83 = arith.constant 0 : index
    %c0_84 = arith.constant 0 : index
    %177 = vector.load %arg33[%c0_82, %c0_83, %c0_84] : memref<4x16x16xf32, #tpu.memory_space<vmem>>, vector<1x16x16xf32>
    %178 = vector.shape_cast %177 : vector<1x16x16xf32> to vector<16x16xf32>
    %179 = vector.shape_cast %176 : vector<16x16xf32> to vector<1x16x16xf32>
    tpu.vector_store %arg33[%c0_82, %c0_83, %c0_84], %179 {strides = array<i32>} : memref<4x16x16xf32, #tpu.memory_space<vmem>>, vector<1x16x16xf32>,
    %180 = arith.truncf %176 : vector<16x16xf32> to vector<16x16xbf16>
    %cst_85 = arith.constant dense<0.000000e+00> : vector<16x8xf32>
    %181 = tpu.matmul %180, %164, %cst_85 {dimension_numbers = #tpu.dot_dimension_numbers<[1], [0], [0], [1], [0, 0, 1, 1], [], []>} : vector<16x16xbf16>, vector<16x8xbf16>, vector<16x8xf32> -> vector<16x8xf32>
    %182 = vector.extract_strided_slice %159 {offsets = [0, 8], sizes = [16, 8], strides = [1, 1]} : vector<16x32xbf16> to vector<16x8xbf16>
    %183 = vector.extract_strided_slice %160 {offsets = [0, 8], sizes = [16, 8], strides = [1, 1]} : vector<16x32xbf16> to vector<16x8xbf16>
    %184 = vector.extract_strided_slice %161 {offsets = [0, 8], sizes = [16, 8], strides = [1, 1]} : vector<16x32xbf16> to vector<16x8xbf16>
    %cst_86 = arith.constant dense<0.000000e+00> : vector<16x16xf32>
    %185 = tpu.matmul %182, %183, %cst_86 {dimension_numbers = #tpu.dot_dimension_numbers<[1], [1], [0], [0], [0, 0, 1, 0], [], []>} : vector<16x8xbf16>, vector<16x8xbf16>, vector<16x16xf32> -> vector<16x16xf32>
    %186 = arith.addf %185, %140 : vector<16x16xf32>
    %cst_87 = arith.constant dense<0xFF800000> : vector<16xf32>
    %187 = vector.multi_reduction <maximumf>, %186, %cst_87 [1] : vector<16x16xf32> to vector<16xf32>
    %188 = vector.shape_cast %187 : vector<16xf32> to vector<16x1xf32>
    %189 = vector.broadcast %188 : vector<16x1xf32> to vector<16x16xf32>
    %190 = arith.subf %186, %189 : vector<16x16xf32>
    %191 = math.exp %190 : vector<16x16xf32>
    %cst_88 = arith.constant dense<0.000000e+00> : vector<16xf32>
    %192 = vector.multi_reduction <add>, %191, %cst_88 [1] : vector<16x16xf32> to vector<16xf32>
    %193 = vector.shape_cast %192 : vector<16xf32> to vector<16x1xf32>
    %194 = tpu.reciprocal %193 {approx = true} : vector<16x1xf32> -> vector<16x1xf32>
    %195 = vector.broadcast %194 : vector<16x1xf32> to vector<16x16xf32>
    %196 = arith.mulf %191, %195 : vector<16x16xf32>
    %c1_89 = arith.constant 1 : index
    %c0_90 = arith.constant 0 : index
    %c0_91 = arith.constant 0 : index
    %197 = vector.load %arg33[%c1_89, %c0_90, %c0_91] : memref<4x16x16xf32, #tpu.memory_space<vmem>>, vector<1x16x16xf32>
    %198 = vector.shape_cast %197 : vector<1x16x16xf32> to vector<16x16xf32>
    %199 = vector.shape_cast %196 : vector<16x16xf32> to vector<1x16x16xf32>
    tpu.vector_store %arg33[%c1_89, %c0_90, %c0_91], %199 {strides = array<i32>} : memref<4x16x16xf32, #tpu.memory_space<vmem>>, vector<1x16x16xf32>,
    %200 = arith.truncf %196 : vector<16x16xf32> to vector<16x16xbf16>
    %cst_92 = arith.constant dense<0.000000e+00> : vector<16x8xf32>
    %201 = tpu.matmul %200, %184, %cst_92 {dimension_numbers = #tpu.dot_dimension_numbers<[1], [0], [0], [1], [0, 0, 1, 1], [], []>} : vector<16x16xbf16>, vector<16x8xbf16>, vector<16x8xf32> -> vector<16x8xf32>
    %202 = vector.extract_strided_slice %159 {offsets = [0, 16], sizes = [16, 8], strides = [1, 1]} : vector<16x32xbf16> to vector<16x8xbf16>
    %203 = vector.extract_strided_slice %160 {offsets = [0, 16], sizes = [16, 8], strides = [1, 1]} : vector<16x32xbf16> to vector<16x8xbf16>
    %204 = vector.extract_strided_slice %161 {offsets = [0, 16], sizes = [16, 8], strides = [1, 1]} : vector<16x32xbf16> to vector<16x8xbf16>
    %cst_93 = arith.constant dense<0.000000e+00> : vector<16x16xf32>
    %205 = tpu.matmul %202, %203, %cst_93 {dimension_numbers = #tpu.dot_dimension_numbers<[1], [1], [0], [0], [0, 0, 1, 0], [], []>} : vector<16x8xbf16>, vector<16x8xbf16>, vector<16x16xf32> -> vector<16x16xf32>
    %206 = arith.addf %205, %140 : vector<16x16xf32>
    %cst_94 = arith.constant dense<0xFF800000> : vector<16xf32>
    %207 = vector.multi_reduction <maximumf>, %206, %cst_94 [1] : vector<16x16xf32> to vector<16xf32>
    %208 = vector.shape_cast %207 : vector<16xf32> to vector<16x1xf32>
    %209 = vector.broadcast %208 : vector<16x1xf32> to vector<16x16xf32>
    %210 = arith.subf %206, %209 : vector<16x16xf32>
    %211 = math.exp %210 : vector<16x16xf32>
    %cst_95 = arith.constant dense<0.000000e+00> : vector<16xf32>
    %212 = vector.multi_reduction <add>, %211, %cst_95 [1] : vector<16x16xf32> to vector<16xf32>
    %213 = vector.shape_cast %212 : vector<16xf32> to vector<16x1xf32>
    %214 = tpu.reciprocal %213 {approx = true} : vector<16x1xf32> -> vector<16x1xf32>
    %215 = vector.broadcast %214 : vector<16x1xf32> to vector<16x16xf32>
    %216 = arith.mulf %211, %215 : vector<16x16xf32>
    %c2_96 = arith.constant 2 : index
    %c0_97 = arith.constant 0 : index
    %c0_98 = arith.constant 0 : index
    %217 = vector.load %arg33[%c2_96, %c0_97, %c0_98] : memref<4x16x16xf32, #tpu.memory_space<vmem>>, vector<1x16x16xf32>
    %218 = vector.shape_cast %217 : vector<1x16x16xf32> to vector<16x16xf32>
    %219 = vector.shape_cast %216 : vector<16x16xf32> to vector<1x16x16xf32>
    tpu.vector_store %arg33[%c2_96, %c0_97, %c0_98], %219 {strides = array<i32>} : memref<4x16x16xf32, #tpu.memory_space<vmem>>, vector<1x16x16xf32>,
    %220 = arith.truncf %216 : vector<16x16xf32> to vector<16x16xbf16>
    %cst_99 = arith.constant dense<0.000000e+00> : vector<16x8xf32>
    %221 = tpu.matmul %220, %204, %cst_99 {dimension_numbers = #tpu.dot_dimension_numbers<[1], [0], [0], [1], [0, 0, 1, 1], [], []>} : vector<16x16xbf16>, vector<16x8xbf16>, vector<16x8xf32> -> vector<16x8xf32>
    %222 = vector.extract_strided_slice %159 {offsets = [0, 24], sizes = [16, 8], strides = [1, 1]} : vector<16x32xbf16> to vector<16x8xbf16>
    %223 = vector.extract_strided_slice %160 {offsets = [0, 24], sizes = [16, 8], strides = [1, 1]} : vector<16x32xbf16> to vector<16x8xbf16>
    %224 = vector.extract_strided_slice %161 {offsets = [0, 24], sizes = [16, 8], strides = [1, 1]} : vector<16x32xbf16> to vector<16x8xbf16>
    %cst_100 = arith.constant dense<0.000000e+00> : vector<16x16xf32>
    %225 = tpu.matmul %222, %223, %cst_100 {dimension_numbers = #tpu.dot_dimension_numbers<[1], [1], [0], [0], [0, 0, 1, 0], [], []>} : vector<16x8xbf16>, vector<16x8xbf16>, vector<16x16xf32> -> vector<16x16xf32>
    %226 = arith.addf %225, %140 : vector<16x16xf32>
    %cst_101 = arith.constant dense<0xFF800000> : vector<16xf32>
    %227 = vector.multi_reduction <maximumf>, %226, %cst_101 [1] : vector<16x16xf32> to vector<16xf32>
    %228 = vector.shape_cast %227 : vector<16xf32> to vector<16x1xf32>
    %229 = vector.broadcast %228 : vector<16x1xf32> to vector<16x16xf32>
    %230 = arith.subf %226, %229 : vector<16x16xf32>
    %231 = math.exp %230 : vector<16x16xf32>
    %cst_102 = arith.constant dense<0.000000e+00> : vector<16xf32>
    %232 = vector.multi_reduction <add>, %231, %cst_102 [1] : vector<16x16xf32> to vector<16xf32>
    %233 = vector.shape_cast %232 : vector<16xf32> to vector<16x1xf32>
    %234 = tpu.reciprocal %233 {approx = true} : vector<16x1xf32> -> vector<16x1xf32>
    %235 = vector.broadcast %234 : vector<16x1xf32> to vector<16x16xf32>
    %236 = arith.mulf %231, %235 : vector<16x16xf32>
    %c3_103 = arith.constant 3 : index
    %c0_104 = arith.constant 0 : index
    %c0_105 = arith.constant 0 : index
    %237 = vector.load %arg33[%c3_103, %c0_104, %c0_105] : memref<4x16x16xf32, #tpu.memory_space<vmem>>, vector<1x16x16xf32>
    %238 = vector.shape_cast %237 : vector<1x16x16xf32> to vector<16x16xf32>
    %239 = vector.shape_cast %236 : vector<16x16xf32> to vector<1x16x16xf32>
    tpu.vector_store %arg33[%c3_103, %c0_104, %c0_105], %239 {strides = array<i32>} : memref<4x16x16xf32, #tpu.memory_space<vmem>>, vector<1x16x16xf32>,
    %240 = arith.truncf %236 : vector<16x16xf32> to vector<16x16xbf16>
    %cst_106 = arith.constant dense<0.000000e+00> : vector<16x8xf32>
    %241 = tpu.matmul %240, %224, %cst_106 {dimension_numbers = #tpu.dot_dimension_numbers<[1], [0], [0], [1], [0, 0, 1, 1], [], []>} : vector<16x16xbf16>, vector<16x8xbf16>, vector<16x8xf32> -> vector<16x8xf32>
    %242 = tpu.concatenate %181, %201, %221, %241 in 1 : vector<16x8xf32>, vector<16x8xf32>, vector<16x8xf32>, vector<16x8xf32> -> vector<16x32xf32>
    %243 = arith.truncf %242 : vector<16x32xf32> to vector<16x32xbf16>
    %c0_107 = arith.constant 0 : index
    %c0_108 = arith.constant 0 : index
    %244 = vector.load %arg21[%c0_107, %c0_108] : memref<32x32xbf16, #tpu.memory_space<vmem>>, vector<32x32xbf16>
    %cst_109 = arith.constant dense<0.000000e+00> : vector<16x32xf32>
    %245 = tpu.matmul %243, %244, %cst_109 {dimension_numbers = #tpu.dot_dimension_numbers<[1], [0], [0], [1], [0, 0, 1, 1], [], []>} : vector<16x32xbf16>, vector<32x32xbf16>, vector<16x32xf32> -> vector<16x32xf32>
    %c0_110 = arith.constant 0 : index
    %c0_111 = arith.constant 0 : index
    %246 = vector.load %arg22[%c0_110, %c0_111] : memref<1x32xf32, #tpu.memory_space<vmem>>, vector<1x32xf32>
    %247 = vector.broadcast %246 : vector<1x32xf32> to vector<16x32xf32>
    %248 = arith.addf %245, %247 : vector<16x32xf32>
    %249 = arith.addf %248, %139 : vector<16x32xf32>
    %c0_112 = arith.constant 0 : index
    %c0_113 = arith.constant 0 : index
    %250 = vector.load %arg23[%c0_112, %c0_113] : memref<1x32xf32, #tpu.memory_space<vmem>>, vector<1x32xf32>
    %c0_114 = arith.constant 0 : index
    %c0_115 = arith.constant 0 : index
    %251 = vector.load %arg24[%c0_114, %c0_115] : memref<1x32xf32, #tpu.memory_space<vmem>>, vector<1x32xf32>
    %cst_116 = arith.constant dense<0.000000e+00> : vector<16xf32>
    %252 = vector.multi_reduction <add>, %249, %cst_116 [1] : vector<16x32xf32> to vector<16xf32>
    %253 = vector.shape_cast %252 : vector<16xf32> to vector<16x1xf32>
    %cst_117 = arith.constant 3.200000e+01 : f32
    %254 = vector.broadcast %cst_117 : f32 to vector<16x1xf32>
    %255 = arith.divf %253, %254 : vector<16x1xf32>
    %256 = vector.broadcast %255 : vector<16x1xf32> to vector<16x32xf32>
    %257 = arith.subf %249, %256 : vector<16x32xf32>
    %258 = arith.mulf %257, %257 : vector<16x32xf32>
    %cst_118 = arith.constant dense<0.000000e+00> : vector<16xf32>
    %259 = vector.multi_reduction <add>, %258, %cst_118 [1] : vector<16x32xf32> to vector<16xf32>
    %260 = vector.shape_cast %259 : vector<16xf32> to vector<16x1xf32>
    %cst_119 = arith.constant 3.200000e+01 : f32
    %261 = vector.broadcast %cst_119 : f32 to vector<16x1xf32>
    %262 = arith.divf %260, %261 : vector<16x1xf32>
    %263 = vector.broadcast %255 : vector<16x1xf32> to vector<16x32xf32>
    %264 = arith.subf %249, %263 : vector<16x32xf32>
    %cst_120 = arith.constant 9.99999974E-6 : f32
    %265 = vector.broadcast %cst_120 : f32 to vector<16x1xf32>
    %266 = arith.addf %262, %265 : vector<16x1xf32>
    %267 = math.rsqrt %266 : vector<16x1xf32>
    %268 = vector.broadcast %267 : vector<16x1xf32> to vector<16x32xf32>
    %269 = arith.mulf %264, %268 : vector<16x32xf32>
    %270 = vector.broadcast %250 : vector<1x32xf32> to vector<16x32xf32>
    %271 = arith.mulf %269, %270 : vector<16x32xf32>
    %272 = vector.broadcast %251 : vector<1x32xf32> to vector<16x32xf32>
    %273 = arith.addf %271, %272 : vector<16x32xf32>
    %274 = vector.broadcast %0 : vector<16x1xf32> to vector<16x32xf32>
    %275 = arith.mulf %273, %274 : vector<16x32xf32>
    %276 = arith.truncf %275 : vector<16x32xf32> to vector<16x32xbf16>
    %c0_121 = arith.constant 0 : index
    %c0_122 = arith.constant 0 : index
    %277 = vector.load %arg25[%c0_121, %c0_122] : memref<32x64xbf16, #tpu.memory_space<vmem>>, vector<32x64xbf16>
    %cst_123 = arith.constant dense<0.000000e+00> : vector<16x64xf32>
    %278 = tpu.matmul %276, %277, %cst_123 {dimension_numbers = #tpu.dot_dimension_numbers<[1], [0], [0], [1], [0, 0, 1, 1], [], []>} : vector<16x32xbf16>, vector<32x64xbf16>, vector<16x64xf32> -> vector<16x64xf32>
    %c0_124 = arith.constant 0 : index
    %c0_125 = arith.constant 0 : index
    %279 = vector.load %arg26[%c0_124, %c0_125] : memref<1x64xf32, #tpu.memory_space<vmem>>, vector<1x64xf32>
    %280 = vector.broadcast %279 : vector<1x64xf32> to vector<16x64xf32>
    %281 = arith.addf %278, %280 : vector<16x64xf32>
    %cst_126 = arith.constant 0.000000e+00 : f32
    %282 = vector.broadcast %cst_126 : f32 to vector<16x64xf32>
    %283 = arith.maximumf %281, %282 : vector<16x64xf32>
    %284 = arith.truncf %283 : vector<16x64xf32> to vector<16x64xbf16>
    %c0_127 = arith.constant 0 : index
    %c0_128 = arith.constant 0 : index
    %285 = vector.load %arg27[%c0_127, %c0_128] : memref<64x32xbf16, #tpu.memory_space<vmem>>, vector<64x32xbf16>
    %cst_129 = arith.constant dense<0.000000e+00> : vector<16x32xf32>
    %286 = tpu.matmul %284, %285, %cst_129 {dimension_numbers = #tpu.dot_dimension_numbers<[1], [0], [0], [1], [0, 0, 1, 1], [], []>} : vector<16x64xbf16>, vector<64x32xbf16>, vector<16x32xf32> -> vector<16x32xf32>
    %c0_130 = arith.constant 0 : index
    %c0_131 = arith.constant 0 : index
    %287 = vector.load %arg28[%c0_130, %c0_131] : memref<1x32xf32, #tpu.memory_space<vmem>>, vector<1x32xf32>
    %288 = vector.broadcast %287 : vector<1x32xf32> to vector<16x32xf32>
    %289 = arith.addf %286, %288 : vector<16x32xf32>
    %290 = arith.addf %289, %275 : vector<16x32xf32>
    %c0_132 = arith.constant 0 : index
    %c0_133 = arith.constant 0 : index
    %291 = vector.load %arg29[%c0_132, %c0_133] : memref<1x32xf32, #tpu.memory_space<vmem>>, vector<1x32xf32>
    %c0_134 = arith.constant 0 : index
    %c0_135 = arith.constant 0 : index
    %292 = vector.load %arg30[%c0_134, %c0_135] : memref<1x32xf32, #tpu.memory_space<vmem>>, vector<1x32xf32>
    %cst_136 = arith.constant dense<0.000000e+00> : vector<16xf32>
    %293 = vector.multi_reduction <add>, %290, %cst_136 [1] : vector<16x32xf32> to vector<16xf32>
    %294 = vector.shape_cast %293 : vector<16xf32> to vector<16x1xf32>
    %cst_137 = arith.constant 3.200000e+01 : f32
    %295 = vector.broadcast %cst_137 : f32 to vector<16x1xf32>
    %296 = arith.divf %294, %295 : vector<16x1xf32>
    %297 = vector.broadcast %296 : vector<16x1xf32> to vector<16x32xf32>
    %298 = arith.subf %290, %297 : vector<16x32xf32>
    %299 = arith.mulf %298, %298 : vector<16x32xf32>
    %cst_138 = arith.constant dense<0.000000e+00> : vector<16xf32>
    %300 = vector.multi_reduction <add>, %299, %cst_138 [1] : vector<16x32xf32> to vector<16xf32>
    %301 = vector.shape_cast %300 : vector<16xf32> to vector<16x1xf32>
    %cst_139 = arith.constant 3.200000e+01 : f32
    %302 = vector.broadcast %cst_139 : f32 to vector<16x1xf32>
    %303 = arith.divf %301, %302 : vector<16x1xf32>
    %304 = vector.broadcast %296 : vector<16x1xf32> to vector<16x32xf32>
    %305 = arith.subf %290, %304 : vector<16x32xf32>
    %cst_140 = arith.constant 9.99999974E-6 : f32
    %306 = vector.broadcast %cst_140 : f32 to vector<16x1xf32>
    %307 = arith.addf %303, %306 : vector<16x1xf32>
    %308 = math.rsqrt %307 : vector<16x1xf32>
    %309 = vector.broadcast %308 : vector<16x1xf32> to vector<16x32xf32>
    %310 = arith.mulf %305, %309 : vector<16x32xf32>
    %311 = vector.broadcast %291 : vector<1x32xf32> to vector<16x32xf32>
    %312 = arith.mulf %310, %311 : vector<16x32xf32>
    %313 = vector.broadcast %292 : vector<1x32xf32> to vector<16x32xf32>
    %314 = arith.addf %312, %313 : vector<16x32xf32>
    %315 = vector.broadcast %0 : vector<16x1xf32> to vector<16x32xf32>
    %316 = arith.mulf %314, %315 : vector<16x32xf32>
    %c0_141 = arith.constant 0 : index
    %c0_142 = arith.constant 0 : index
    %317 = vector.load %arg31[%c0_141, %c0_142] : memref<16x32xf32, #tpu.memory_space<vmem>>, vector<16x32xf32>
    tpu.vector_store %arg31[%c0_141, %c0_142], %316 {strides = array<i32>} : memref<16x32xf32, #tpu.memory_space<vmem>>, vector<16x32xf32>,
    return
  }
}

</mosaic_0001>

<llo_original>
// kernel: decoder_layer_forward.1
$region0: #{decoder_layer_forward.1}
  #allocation0 [shape = 'u32[]', space=smem, size = 0x4, offset = 0x4, fixed_abs, tag = 'smem constant byte address 0x4 - core index']
  #allocation1 [shape = 'u32[72,128]{1,0:T(1,128)}', space=vmem, size = 0x9000, scoped, tag = 'internal scratch']
  %s0 = inlined_call_operand.smem [shape: u32[34], index: -1, kind: input, shape index: {}]
  %s1 = sld [smem:[%s0]]
  %s2 = scalar_lea.smem %s0, 1
  %s3 = sld [smem:[%s2]]
  %s4 = scalar_lea.smem %s0, 2
  %s5 = sld [smem:[%s4]]
  %s6 = scalar_lea.smem %s0, 3
  %s7 = sld [smem:[%s6]]
  %s8 = scalar_lea.smem %s0, 4
  %s9 = sld [smem:[%s8]]
  %s10 = scalar_lea.smem %s0, 5
  %s11 = sld [smem:[%s10]]
  %s12 = scalar_lea.smem %s0, 6
  %s13 = sld [smem:[%s12]]
  %s14 = scalar_lea.smem %s0, 7
  %s15 = sld [smem:[%s14]]
  %s16 = scalar_lea.smem %s0, 8
  %s17 = sld [smem:[%s16]]
  %s18 = scalar_lea.smem %s0, 9
  %s19 = sld [smem:[%s18]]
  %s20 = scalar_lea.smem %s0, 10
  %s21 = sld [smem:[%s20]]
  %s22 = scalar_lea.smem %s0, 11
  %s23 = sld [smem:[%s22]]
  %s24 = scalar_lea.smem %s0, 12
  %s25 = sld [smem:[%s24]]
  %s26 = scalar_lea.smem %s0, 13
  %s27 = sld [smem:[%s26]]
  %s28 = scalar_lea.smem %s0, 14
  %s29 = sld [smem:[%s28]]
  %s30 = scalar_lea.smem %s0, 15
  %s31 = sld [smem:[%s30]]
  %s32 = scalar_lea.smem %s0, 16
  %s33 = sld [smem:[%s32]]
  %s34 = scalar_lea.smem %s0, 17
  %s35 = sld [smem:[%s34]]
  %s36 = scalar_lea.smem %s0, 18
  %s37 = sld [smem:[%s36]]
  %s38 = scalar_lea.smem %s0, 19
  %s39 = sld [smem:[%s38]]
  %s40 = scalar_lea.smem %s0, 20
  %s41 = sld [smem:[%s40]]
  %s42 = scalar_lea.smem %s0, 21
  %s43 = sld [smem:[%s42]]
  %s44 = scalar_lea.smem %s0, 22
  %s45 = sld [smem:[%s44]]
  %s46 = scalar_lea.smem %s0, 23
  %s47 = sld [smem:[%s46]]
  %s48 = scalar_lea.smem %s0, 24
  %s49 = sld [smem:[%s48]]
  %s50 = scalar_lea.smem %s0, 25
  %s51 = sld [smem:[%s50]]
  %s52 = scalar_lea.smem %s0, 26
  %s53 = sld [smem:[%s52]]
  %s54 = scalar_lea.smem %s0, 27
  %s55 = sld [smem:[%s54]]
  %s56 = scalar_lea.smem %s0, 28
  %s57 = sld [smem:[%s56]]
  %s58 = scalar_lea.smem %s0, 29
  %s59 = sld [smem:[%s58]]
  %s60 = scalar_lea.smem %s0, 30
  %s61 = sld [smem:[%s60]]
  %s62 = scalar_lea.smem %s0, 31
  %s63 = sld [smem:[%s62]]
  %s64 = scalar_lea.smem %s0, 32
  %s65 = sld [smem:[%s64]]
  %s66 = scalar_lea.smem %s0, 33
  %s67 = sld [smem:[%s66]]
  %68 = xla_tuple %s63, %s65, %s67
  %s69 = sld [smem:[#allocation0]]
  $region150: #{decoder_layer_forward.1} parent=0
    _
  %s71 = ssub.s32 1, %s69
  %s72 = scalar_select 0, %s71, %s69
  $region1: #{decoder_layer_forward.1} parent=0
    #allocation2 [shape = 'u8[8192]{0}', space=vmem, size = 0x2000, scoped, tag = 'output window, operand 0, single buffered']
    #allocation3 [shape = 's32[1]{0}', space=sflag, size = 0x4, scoped, tag = 'scoped memory for decoder_layer_forward.1']
    %73 = vsyncpa [#allocation3], 0
    // Predicated region
    $region2: #{decoder_layer_forward.1} parent=1 // pred_check
      _
    $region3: #{decoder_layer_forward.1} parent=1 // pred_check_branch
      %75 = sbr.rel (0) target = $region5
    $region4: #{decoder_layer_forward.1} parent=1 // pred_region
      _
    $region5: #{decoder_layer_forward.1} parent=1 // pred_fallthru
      _
    // Predicated region
    $region6: #{decoder_layer_forward.1} parent=1 // pred_check
      _
    $region7: #{decoder_layer_forward.1} parent=1 // pred_check_branch
      %77 = sbr.rel (0) target = $region9
    $region8: #{decoder_layer_forward.1} parent=1 // pred_region
      _
    $region9: #{decoder_layer_forward.1} parent=1 // pred_fallthru
      _
    // Predicated region
    $region10: #{decoder_layer_forward.1} parent=1 // pred_check
      _
    $region11: #{decoder_layer_forward.1} parent=1 // pred_check_branch
      %79 = sbr.rel (0) target = $region13
    $region12: #{decoder_layer_forward.1} parent=1 // pred_region
      _
    $region13: #{decoder_layer_forward.1} parent=1 // pred_fallthru
      _
    // Predicated region
    $region14: #{decoder_layer_forward.1} parent=1 // pred_check
      _
    $region15: #{decoder_layer_forward.1} parent=1 // pred_check_branch
      %81 = sbr.rel (0) target = $region17
    $region16: #{decoder_layer_forward.1} parent=1 // pred_region
      _
    $region17: #{decoder_layer_forward.1} parent=1 // pred_fallthru
      _
    // Predicated region
    $region18: #{decoder_layer_forward.1} parent=1 // pred_check
      _
    $region19: #{decoder_layer_forward.1} parent=1 // pred_check_branch
      %83 = sbr.rel (0) target = $region21
    $region20: #{decoder_layer_forward.1} parent=1 // pred_region
      _
    $region21: #{decoder_layer_forward.1} parent=1 // pred_fallthru
      _
    // Predicated region
    $region22: #{decoder_layer_forward.1} parent=1 // pred_check
      _
    $region23: #{decoder_layer_forward.1} parent=1 // pred_check_branch
      %85 = sbr.rel (0) target = $region25
    $region24: #{decoder_layer_forward.1} parent=1 // pred_region
      _
    $region25: #{decoder_layer_forward.1} parent=1 // pred_fallthru
      _
    // Predicated region
    $region26: #{decoder_layer_forward.1} parent=1 // pred_check
      _
    $region27: #{decoder_layer_forward.1} parent=1 // pred_check_branch
      %87 = sbr.rel (0) target = $region29
    $region28: #{decoder_layer_forward.1} parent=1 // pred_region
      _
    $region29: #{decoder_layer_forward.1} parent=1 // pred_fallthru
      _
    // Predicated region
    $region30: #{decoder_layer_forward.1} parent=1 // pred_check
      _
    $region31: #{decoder_layer_forward.1} parent=1 // pred_check_branch
      %89 = sbr.rel (0) target = $region33
    $region32: #{decoder_layer_forward.1} parent=1 // pred_region
      _
    $region33: #{decoder_layer_forward.1} parent=1 // pred_fallthru
      _
    // Predicated region
    $region34: #{decoder_layer_forward.1} parent=1 // pred_check
      _
    $region35: #{decoder_layer_forward.1} parent=1 // pred_check_branch
      %91 = sbr.rel (0) target = $region37
    $region36: #{decoder_layer_forward.1} parent=1 // pred_region
      _
    $region37: #{decoder_layer_forward.1} parent=1 // pred_fallthru
      _
    // Predicated region
    $region38: #{decoder_layer_forward.1} parent=1 // pred_check
      _
    $region39: #{decoder_layer_forward.1} parent=1 // pred_check_branch
      %93 = sbr.rel (0) target = $region41
    $region40: #{decoder_layer_forward.1} parent=1 // pred_region
      _
    $region41: #{decoder_layer_forward.1} parent=1 // pred_fallthru
      _
    // Predicated region
    $region42: #{decoder_layer_forward.1} parent=1 // pred_check
      _
    $region43: #{decoder_layer_forward.1} parent=1 // pred_check_branch
      %95 = sbr.rel (0) target = $region45
    $region44: #{decoder_layer_forward.1} parent=1 // pred_region
      _
    $region45: #{decoder_layer_forward.1} parent=1 // pred_fallthru
      _
    // Predicated region
    $region46: #{decoder_layer_forward.1} parent=1 // pred_check
      _
    $region47: #{decoder_layer_forward.1} parent=1 // pred_check_branch
      %97 = sbr.rel (0) target = $region49
    $region48: #{decoder_layer_forward.1} parent=1 // pred_region
      _
    $region49: #{decoder_layer_forward.1} parent=1 // pred_fallthru
      _
    // Predicated region
    $region50: #{decoder_layer_forward.1} parent=1 // pred_check
      _
    $region51: #{decoder_layer_forward.1} parent=1 // pred_check_branch
      %99 = sbr.rel (0) target = $region53
    $region52: #{decoder_layer_forward.1} parent=1 // pred_region
      _
    $region53: #{decoder_layer_forward.1} parent=1 // pred_fallthru
      _
    // Predicated region
    $region54: #{decoder_layer_forward.1} parent=1 // pred_check
      _
    $region55: #{decoder_layer_forward.1} parent=1 // pred_check_branch
      %101 = sbr.rel (0) target = $region57
    $region56: #{decoder_layer_forward.1} parent=1 // pred_region
      _
    $region57: #{decoder_layer_forward.1} parent=1 // pred_fallthru
      _
    // Predicated region
    $region58: #{decoder_layer_forward.1} parent=1 // pred_check
      _
    $region59: #{decoder_layer_forward.1} parent=1 // pred_check_branch
      %103 = sbr.rel (0) target = $region61
    $region60: #{decoder_layer_forward.1} parent=1 // pred_region
      _
    $region61: #{decoder_layer_forward.1} parent=1 // pred_fallthru
      _
    // Predicated region
    $region62: #{decoder_layer_forward.1} parent=1 // pred_check
      _
    $region63: #{decoder_layer_forward.1} parent=1 // pred_check_branch
      %105 = sbr.rel (0) target = $region65
    $region64: #{decoder_layer_forward.1} parent=1 // pred_region
      _
    $region65: #{decoder_layer_forward.1} parent=1 // pred_fallthru
      _
    // Predicated region
    $region66: #{decoder_layer_forward.1} parent=1 // pred_check
      _
    $region67: #{decoder_layer_forward.1} parent=1 // pred_check_branch
      %107 = sbr.rel (0) target = $region69
    $region68: #{decoder_layer_forward.1} parent=1 // pred_region
      _
    $region69: #{decoder_layer_forward.1} parent=1 // pred_fallthru
      _
    // Predicated region
    $region70: #{decoder_layer_forward.1} parent=1 // pred_check
      _
    $region71: #{decoder_layer_forward.1} parent=1 // pred_check_branch
      %109 = sbr.rel (0) target = $region73
    $region72: #{decoder_layer_forward.1} parent=1 // pred_region
      _
    $region73: #{decoder_layer_forward.1} parent=1 // pred_fallthru
      _
    // Predicated region
    $region74: #{decoder_layer_forward.1} parent=1 // pred_check
      _
    $region75: #{decoder_layer_forward.1} parent=1 // pred_check_branch
      %111 = sbr.rel (0) target = $region77
    $region76: #{decoder_layer_forward.1} parent=1 // pred_region
      _
    $region77: #{decoder_layer_forward.1} parent=1 // pred_fallthru
      _
    // Predicated region
    $region78: #{decoder_layer_forward.1} parent=1 // pred_check
      _
    $region79: #{decoder_layer_forward.1} parent=1 // pred_check_branch
      %113 = sbr.rel (0) target = $region81
    $region80: #{decoder_layer_forward.1} parent=1 // pred_region
      _
    $region81: #{decoder_layer_forward.1} parent=1 // pred_fallthru
      _
    // Predicated region
    $region82: #{decoder_layer_forward.1} parent=1 // pred_check
      _
    $region83: #{decoder_layer_forward.1} parent=1 // pred_check_branch
      %115 = sbr.rel (0) target = $region85
    $region84: #{decoder_layer_forward.1} parent=1 // pred_region
      _
    $region85: #{decoder_layer_forward.1} parent=1 // pred_fallthru
      _
    // Predicated region
    $region86: #{decoder_layer_forward.1} parent=1 // pred_check
      _
    $region87: #{decoder_layer_forward.1} parent=1 // pred_check_branch
      %117 = sbr.rel (0) target = $region89
    $region88: #{decoder_layer_forward.1} parent=1 // pred_region
      _
    $region89: #{decoder_layer_forward.1} parent=1 // pred_fallthru
      _
    // Predicated region
    $region90: #{decoder_layer_forward.1} parent=1 // pred_check
      _
    $region91: #{decoder_layer_forward.1} parent=1 // pred_check_branch
      %119 = sbr.rel (0) target = $region93
    $region92: #{decoder_layer_forward.1} parent=1 // pred_region
      _
    $region93: #{decoder_layer_forward.1} parent=1 // pred_fallthru
      _
    // Predicated region
    $region94: #{decoder_layer_forward.1} parent=1 // pred_check
      _
    $region95: #{decoder_layer_forward.1} parent=1 // pred_check_branch
      %121 = sbr.rel (0) target = $region97
    $region96: #{decoder_layer_forward.1} parent=1 // pred_region
      _
    $region97: #{decoder_layer_forward.1} parent=1 // pred_fallthru
      _
    // Predicated region
    $region98: #{decoder_layer_forward.1} parent=1 // pred_check
      _
    $region99: #{decoder_layer_forward.1} parent=1 // pred_check_branch
      %123 = sbr.rel (0) target = $region101
    $region100: #{decoder_layer_forward.1} parent=1 // pred_region
      _
    $region101: #{decoder_layer_forward.1} parent=1 // pred_fallthru
      _
    // Predicated region
    $region102: #{decoder_layer_forward.1} parent=1 // pred_check
      _
    $region103: #{decoder_layer_forward.1} parent=1 // pred_check_branch
      %125 = sbr.rel (0) target = $region105
    $region104: #{decoder_layer_forward.1} parent=1 // pred_region
      _
    $region105: #{decoder_layer_forward.1} parent=1 // pred_fallthru
      _
    // Predicated region
    $region106: #{decoder_layer_forward.1} parent=1 // pred_check
      _
    $region107: #{decoder_layer_forward.1} parent=1 // pred_check_branch
      %127 = sbr.rel (0) target = $region109
    $region108: #{decoder_layer_forward.1} parent=1 // pred_region
      _
    $region109: #{decoder_layer_forward.1} parent=1 // pred_fallthru
      _
    // Predicated region
    $region110: #{decoder_layer_forward.1} parent=1 // pred_check
      _
    $region111: #{decoder_layer_forward.1} parent=1 // pred_check_branch
      %129 = sbr.rel (0) target = $region113
    $region112: #{decoder_layer_forward.1} parent=1 // pred_region
      _
    $region113: #{decoder_layer_forward.1} parent=1 // pred_fallthru
      _
    // Predicated region
    $region114: #{decoder_layer_forward.1} parent=1 // pred_check
      _
    $region115: #{decoder_layer_forward.1} parent=1 // pred_check_branch
      %131 = sbr.rel (0) target = $region117
    $region116: #{decoder_layer_forward.1} parent=1 // pred_region
      _
    $region117: #{decoder_layer_forward.1} parent=1 // pred_fallthru
      _
    // Predicated region
    $region118: #{decoder_layer_forward.1} parent=1 // pred_check
      _
    $region119: #{decoder_layer_forward.1} parent=1 // pred_check_branch
      %133 = sbr.rel (0) target = $region121
    $region120: #{decoder_layer_forward.1} parent=1 // pred_region
      _
    $region121: #{decoder_layer_forward.1} parent=1 // pred_fallthru
      _
    // Predicated region
    $region122: #{decoder_layer_forward.1} parent=1 // pred_check
      _
    $region123: #{decoder_layer_forward.1} parent=1 // pred_check_branch
      %135 = sbr.rel (0) target = $region125
    $region124: #{decoder_layer_forward.1} parent=1 // pred_region
      _
    $region125: #{decoder_layer_forward.1} parent=1 // pred_fallthru
      _
    %v137 = vld [vmem:[%s5] sm:$0xff]
    %v138 = vld [vmem:[%s5 + $0x8] sm:$0xff]
    %v139 = vld [vmem:[%s1] sm:$0xff]
    %v140 = vld [vmem:[%s1 + $0x8] sm:$0xff]
    %v141 = vld [vmem:[%s3] sm:$0xf]
    %v142 = vld [vmem:[%s3 + $0x4] sm:$0xf]
    %v143 = vpack.c.bf16 %v140, %v139
    %v144 = vld [vmem:[%s7] sm:$0xff]
    %v145 = vld [vmem:[%s7 + $0x8] sm:$0xff]
    %v146 = vld [vmem:[%s11] sm:$0xf]
    %v147 = vld [vmem:[%s11 + $0x4] sm:$0xf]
    %v148 = vld [vmem:[%s11 + $0x8] sm:$0xf]
    %v149 = vld [vmem:[%s11 + $0xc] sm:$0xf]
    %v150 = vld [vmem:[%s13] sm:$0x1]
    %v152 = vperm.slane %v150, 0
    %v158 = vunpack.c.l.b16 %v146
    %v159 = vunpack.c.l.b16 %v147
    %v160 = vunpack.c.l.b16 %v148
    %v161 = vunpack.c.l.b16 %v149
    %v162 = vpack.c.b16 %v159, %v158
    %v163 = vpack.c.b16 %v161, %v160
    %vm166 = vcmask 261120
    %v168 = vsel %vm166, %v143, 0
    %170 = vmatpush.bf16.msra.mxu0 0
    %171 = vmatpush.bf16.msra.mxu0 0
    %172 = vmatpush.bf16.msra.mxu0 0
    %173 = vmatpush.bf16.msra.mxu0 0
    %174 = vmatpush.bf16.msra.mxu0 0
    %175 = vmatpush.bf16.msra.mxu0 0
    %176 = vmatpush.bf16.msra.mxu0 %v163
    %177 = vmatpush.bf16.msra.mxu0 %v162
    %178 = vmatmul.bf16.gmra.mxu0 %v168
    %v179 = vpop.f32.mrf.mxu0
    %v180 = vadd.f32 %v152, %v179
    %v181 = vpop.f32.mrf.mxu0
    %v182 = vadd.f32 %v152, %v181
    %183 = vdwg.mxu0
    %v184 = vmul.f32 %v180, 0.35355338
    %v185 = vmul.f32 %v182, 0.35355338
    %v186 = vld [vmem:[%s15] sm:$0xf]
    %v187 = vld [vmem:[%s15 + $0x4] sm:$0xf]
    %v188 = vld [vmem:[%s15 + $0x8] sm:$0xf]
    %v189 = vld [vmem:[%s15 + $0xc] sm:$0xf]
    %v190 = vld [vmem:[%s17] sm:$0x1]
    %v192 = vperm.slane %v190, 0
    %v198 = vunpack.c.l.b16 %v186
    %v199 = vunpack.c.l.b16 %v187
    %v200 = vunpack.c.l.b16 %v188
    %v201 = vunpack.c.l.b16 %v189
    %v202 = vpack.c.b16 %v199, %v198
    %v203 = vpack.c.b16 %v201, %v200
    %206 = vmatpush.bf16.msra.mxu0 0
    %207 = vmatpush.bf16.msra.mxu0 0
    %208 = vmatpush.bf16.msra.mxu0 0
    %209 = vmatpush.bf16.msra.mxu0 0
    %210 = vmatpush.bf16.msra.mxu0 0
    %211 = vmatpush.bf16.msra.mxu0 0
    %212 = vmatpush.bf16.msra.mxu0 %v203
    %213 = vmatpush.bf16.msra.mxu0 %v202
    %214 = vmatmul.bf16.gmra.mxu0 %v168
    %v215 = vpop.f32.mrf.mxu0
    %v216 = vadd.f32 %v192, %v215
    %v217 = vpop.f32.mrf.mxu0
    %v218 = vadd.f32 %v192, %v217
    %219 = vdwg.mxu0
    %v220 = vld [vmem:[%s19] sm:$0xf]
    %v221 = vld [vmem:[%s19 + $0x4] sm:$0xf]
    %v222 = vld [vmem:[%s19 + $0x8] sm:$0xf]
    %v223 = vld [vmem:[%s19 + $0xc] sm:$0xf]
    %v224 = vld [vmem:[%s21] sm:$0x1]
    %v226 = vperm.slane %v224, 0
    %v232 = vunpack.c.l.b16 %v220
    %v233 = vunpack.c.l.b16 %v221
    %v234 = vunpack.c.l.b16 %v222
    %v235 = vunpack.c.l.b16 %v223
    %v236 = vpack.c.b16 %v233, %v232
    %v237 = vpack.c.b16 %v235, %v234
    %240 = vmatpush.bf16.msra.mxu0 0
    %241 = vmatpush.bf16.msra.mxu0 0
    %242 = vmatpush.bf16.msra.mxu0 0
    %243 = vmatpush.bf16.msra.mxu0 0
    %244 = vmatpush.bf16.msra.mxu0 0
    %245 = vmatpush.bf16.msra.mxu0 0
    %246 = vmatpush.bf16.msra.mxu0 %v237
    %247 = vmatpush.bf16.msra.mxu0 %v236
    %248 = vmatmul.bf16.gmra.mxu0 %v168
    %v249 = vpop.f32.mrf.mxu0
    %v250 = vadd.f32 %v226, %v249
    %v251 = vpop.f32.mrf.mxu0
    %v252 = vadd.f32 %v226, %v251
    %253 = vdwg.mxu0
    %v254 = vpack.c.bf16 %v184, %v184
    %v255 = vpack.c.bf16 %v185, %v185
    %v256 = vpack.c.bf16 %v216, %v216
    %v257 = vpack.c.bf16 %v218, %v218
    %v258 = vpack.c.bf16 %v250, %v250
    %v259 = vpack.c.bf16 %v252, %v252
    %v262 = vunpack.c.l.b16 %v254
    %v263 = vunpack.c.l.b16 %v255
    %v264 = vpack.c.b16 %v263, %v262
    %v267 = vunpack.c.l.b16 %v256
    %v268 = vunpack.c.l.b16 %v257
    %v269 = vpack.c.b16 %v268, %v267
    %vm270 = vcmask 64512
    %v272 = vsel %vm270, %v264, 0
    %v275 = vsel %vm270, %v269, 0
    %277 = vmatpush.bf16.xpose.msra.mxu0 0
    %278 = vmatpush.bf16.xpose.msra.mxu0 0
    %279 = vmatpush.bf16.xpose.msra.mxu0 0
    %280 = vmatpush.bf16.xpose.msra.mxu0 0
    %281 = vmatpush.bf16.xpose.msra.mxu0 0
    %282 = vmatpush.bf16.xpose.msra.mxu0 0
    %283 = vmatpush.bf16.xpose.msra.mxu0 0
    %284 = vmatpush.bf16.xpose.msra.mxu0 %v275
    %285 = vmatmul.bf16.gmra.mxu0 %v272
    %v286 = vpop.f32.mrf.mxu0
    %v287 = vadd.f32 %v144, %v286
    %v288 = vpop.f32.mrf.mxu0
    %v289 = vadd.f32 %v145, %v288
    %290 = vdwg.mxu0
    %vm291 = vcmask 130048
    %v292 = vsel %vm291, %v287, -inf
    %293 = vmax.xlane.f32.xlu0 %v292
    %v294 = vpop.xlane.xlu0 %293
    %v295 = vsel %vm291, %v289, -inf
    %296 = vmax.xlane.f32.xlu0 %v295
    %v297 = vpop.xlane.xlu0 %296
    %v298 = vsub.f32 %v287, %v294
    %v299 = vsub.f32 %v289, %v297
    %v300 = vmul.f32 %v298, 1.442695
    %v301 = vpow.pop %v300
    %v302 = vmul.f32 %v299, 1.442695
    %v303 = vpow.pop %v302
    %v304 = vsel %vm291, %v301, 0.0
    %305 = vadd.xlane.f32.xlu0 %v304
    %v306 = vpop.xlane.xlu0 %305
    %v307 = vsel %vm291, %v303, 0.0
    %308 = vadd.xlane.f32.xlu0 %v307
    %v309 = vpop.xlane.xlu0 %308
    %v310 = vrcp.pop %v306
    %v311 = vrcp.pop %v309
    %v312 = vmul.f32 %v301, %v310
    %v313 = vmul.f32 %v303, %v311
    %314 = vst.msk [vmem:[%s65] sm:$0xff] %vm291, %v312
    %315 = vst.msk [vmem:[%s65 + $0x8] sm:$0xff] %vm291, %v313
    %v316 = vpack.c.bf16 %v313, %v312
    %v319 = vunpack.c.l.b16 %v258
    %v320 = vunpack.c.l.b16 %v259
    %v321 = vpack.c.b16 %v320, %v319
    %v324 = vsel %vm291, %v316, 0
    %326 = vmatpush.bf16.msra.mxu0 0
    %327 = vmatpush.bf16.msra.mxu0 0
    %328 = vmatpush.bf16.msra.mxu0 0
    %329 = vmatpush.bf16.msra.mxu0 0
    %330 = vmatpush.bf16.msra.mxu0 0
    %331 = vmatpush.bf16.msra.mxu0 0
    %332 = vmatpush.bf16.msra.mxu0 0
    %333 = vmatpush.bf16.msra.mxu0 %v321
    %334 = vmatmul.bf16.gmra.mxu0 %v324
    %v335 = vpop.f32.mrf.mxu0
    %v336 = vadd.f32 0.0, %v335
    %v337 = vpop.f32.mrf.mxu0
    %v338 = vadd.f32 0.0, %v337
    %339 = vdwg.mxu0
    %340 = vrot.lane.b32.xlu0 %v264, 120
    %v341 = vpop.permute.xlu0 %340
    %342 = vrot.lane.b32.xlu0 %v269, 120
    %v343 = vpop.permute.xlu0 %342
    %v345 = vsel %vm270, %v341, 0
    %v348 = vsel %vm270, %v343, 0
    %350 = vmatpush.bf16.xpose.msra.mxu0 0
    %351 = vmatpush.bf16.xpose.msra.mxu0 0
    %352 = vmatpush.bf16.xpose.msra.mxu0 0
    %353 = vmatpush.bf16.xpose.msra.mxu0 0
    %354 = vmatpush.bf16.xpose.msra.mxu0 0
    %355 = vmatpush.bf16.xpose.msra.mxu0 0
    %356 = vmatpush.bf16.xpose.msra.mxu0 0
    %357 = vmatpush.bf16.xpose.msra.mxu0 %v348
    %358 = vmatmul.bf16.gmra.mxu0 %v345
    %v359 = vpop.f32.mrf.mxu0
    %v360 = vadd.f32 %v144, %v359
    %v361 = vpop.f32.mrf.mxu0
    %v362 = vadd.f32 %v145, %v361
    %363 = vdwg.mxu0
    %v364 = vsel %vm291, %v360, -inf
    %365 = vmax.xlane.f32.xlu0 %v364
    %v366 = vpop.xlane.xlu0 %365
    %v367 = vsel %vm291, %v362, -inf
    %368 = vmax.xlane.f32.xlu0 %v367
    %v369 = vpop.xlane.xlu0 %368
    %v370 = vsub.f32 %v360, %v366
    %v371 = vsub.f32 %v362, %v369
    %v372 = vmul.f32 %v370, 1.442695
    %v373 = vpow.pop %v372
    %v374 = vmul.f32 %v371, 1.442695
    %v375 = vpow.pop %v374
    %v376 = vsel %vm291, %v373, 0.0
    %377 = vadd.xlane.f32.xlu0 %v376
    %v378 = vpop.xlane.xlu0 %377
    %v379 = vsel %vm291, %v375, 0.0
    %380 = vadd.xlane.f32.xlu0 %v379
    %v381 = vpop.xlane.xlu0 %380
    %v382 = vrcp.pop %v378
    %v383 = vrcp.pop %v381
    %v384 = vmul.f32 %v373, %v382
    %v385 = vmul.f32 %v375, %v383
    %s386 = scalar_lea.vmem %s65, 16
    %387 = vst.msk [vmem:[%s386] sm:$0xff] %vm291, %v384
    %388 = vst.msk [vmem:[%s386 + $0x8] sm:$0xff] %vm291, %v385
    %v389 = vpack.c.bf16 %v385, %v384
    %390 = vrot.lane.b32.xlu0 %v321, 120
    %v391 = vpop.permute.xlu0 %390
    %v394 = vsel %vm291, %v389, 0
    %396 = vmatpush.bf16.msra.mxu0 0
    %397 = vmatpush.bf16.msra.mxu0 0
    %398 = vmatpush.bf16.msra.mxu0 0
    %399 = vmatpush.bf16.msra.mxu0 0
    %400 = vmatpush.bf16.msra.mxu0 0
    %401 = vmatpush.bf16.msra.mxu0 0
    %402 = vmatpush.bf16.msra.mxu0 0
    %403 = vmatpush.bf16.msra.mxu0 %v391
    %404 = vmatmul.bf16.gmra.mxu0 %v394
    %v405 = vpop.f32.mrf.mxu0
    %v406 = vadd.f32 0.0, %v405
    %v407 = vpop.f32.mrf.mxu0
    %v408 = vadd.f32 0.0, %v407
    %409 = vdwg.mxu0
    %410 = vrot.lane.b32.xlu0 %v264, 112
    %v411 = vpop.permute.xlu0 %410
    %412 = vrot.lane.b32.xlu0 %v269, 112
    %v413 = vpop.permute.xlu0 %412
    %v415 = vsel %vm270, %v411, 0
    %v418 = vsel %vm270, %v413, 0
    %420 = vmatpush.bf16.xpose.msra.mxu0 0
    %421 = vmatpush.bf16.xpose.msra.mxu0 0
    %422 = vmatpush.bf16.xpose.msra.mxu0 0
    %423 = vmatpush.bf16.xpose.msra.mxu0 0
    %424 = vmatpush.bf16.xpose.msra.mxu0 0
    %425 = vmatpush.bf16.xpose.msra.mxu0 0
    %426 = vmatpush.bf16.xpose.msra.mxu0 0
    %427 = vmatpush.bf16.xpose.msra.mxu0 %v418
    %428 = vmatmul.bf16.gmra.mxu0 %v415
    %v429 = vpop.f32.mrf.mxu0
    %v430 = vadd.f32 %v144, %v429
    %v431 = vpop.f32.mrf.mxu0
    %v432 = vadd.f32 %v145, %v431
    %433 = vdwg.mxu0
    %v434 = vsel %vm291, %v430, -inf
    %435 = vmax.xlane.f32.xlu0 %v434
    %v436 = vpop.xlane.xlu0 %435
    %v437 = vsel %vm291, %v432, -inf
    %438 = vmax.xlane.f32.xlu0 %v437
    %v439 = vpop.xlane.xlu0 %438
    %v440 = vsub.f32 %v430, %v436
    %v441 = vsub.f32 %v432, %v439
    %v442 = vmul.f32 %v440, 1.442695
    %v443 = vpow.pop %v442
    %v444 = vmul.f32 %v441, 1.442695
    %v445 = vpow.pop %v444
    %v446 = vsel %vm291, %v443, 0.0
    %447 = vadd.xlane.f32.xlu0 %v446
    %v448 = vpop.xlane.xlu0 %447
    %v449 = vsel %vm291, %v445, 0.0
    %450 = vadd.xlane.f32.xlu0 %v449
    %v451 = vpop.xlane.xlu0 %450
    %v452 = vrcp.pop %v448
    %v453 = vrcp.pop %v451
    %v454 = vmul.f32 %v443, %v452
    %v455 = vmul.f32 %v445, %v453
    %s456 = scalar_lea.vmem %s65, 32
    %457 = vst.msk [vmem:[%s456] sm:$0xff] %vm291, %v454
    %458 = vst.msk [vmem:[%s456 + $0x8] sm:$0xff] %vm291, %v455
    %v459 = vpack.c.bf16 %v455, %v454
    %460 = vrot.lane.b32.xlu0 %v321, 112
    %v461 = vpop.permute.xlu0 %460
    %v464 = vsel %vm291, %v459, 0
    %466 = vmatpush.bf16.msra.mxu0 0
    %467 = vmatpush.bf16.msra.mxu0 0
    %468 = vmatpush.bf16.msra.mxu0 0
    %469 = vmatpush.bf16.msra.mxu0 0
    %470 = vmatpush.bf16.msra.mxu0 0
    %471 = vmatpush.bf16.msra.mxu0 0
    %472 = vmatpush.bf16.msra.mxu0 0
    %473 = vmatpush.bf16.msra.mxu0 %v461
    %474 = vmatmul.bf16.gmra.mxu0 %v464
    %v475 = vpop.f32.mrf.mxu0
    %v476 = vadd.f32 0.0, %v475
    %v477 = vpop.f32.mrf.mxu0
    %v478 = vadd.f32 0.0, %v477
    %479 = vdwg.mxu0
    %480 = vrot.lane.b32.xlu0 %v264, 104
    %v481 = vpop.permute.xlu0 %480
    %482 = vrot.lane.b32.xlu0 %v269, 104
    %v483 = vpop.permute.xlu0 %482
    %v485 = vsel %vm270, %v481, 0
    %v488 = vsel %vm270, %v483, 0
    %490 = vmatpush.bf16.xpose.msra.mxu0 0
    %491 = vmatpush.bf16.xpose.msra.mxu0 0
    %492 = vmatpush.bf16.xpose.msra.mxu0 0
    %493 = vmatpush.bf16.xpose.msra.mxu0 0
    %494 = vmatpush.bf16.xpose.msra.mxu0 0
    %495 = vmatpush.bf16.xpose.msra.mxu0 0
    %496 = vmatpush.bf16.xpose.msra.mxu0 0
    %497 = vmatpush.bf16.xpose.msra.mxu0 %v488
    %498 = vmatmul.bf16.gmra.mxu0 %v485
    %v499 = vpop.f32.mrf.mxu0
    %v500 = vadd.f32 %v144, %v499
    %v501 = vpop.f32.mrf.mxu0
    %v502 = vadd.f32 %v145, %v501
    %503 = vdwg.mxu0
    %v504 = vsel %vm291, %v500, -inf
    %505 = vmax.xlane.f32.xlu0 %v504
    %v506 = vpop.xlane.xlu0 %505
    %v507 = vsel %vm291, %v502, -inf
    %508 = vmax.xlane.f32.xlu0 %v507
    %v509 = vpop.xlane.xlu0 %508
    %v510 = vsub.f32 %v500, %v506
    %v511 = vsub.f32 %v502, %v509
    %v512 = vmul.f32 %v510, 1.442695
    %v513 = vpow.pop %v512
    %v514 = vmul.f32 %v511, 1.442695
    %v515 = vpow.pop %v514
    %v516 = vsel %vm291, %v513, 0.0
    %517 = vadd.xlane.f32.xlu0 %v516
    %v518 = vpop.xlane.xlu0 %517
    %v519 = vsel %vm291, %v515, 0.0
    %520 = vadd.xlane.f32.xlu0 %v519
    %v521 = vpop.xlane.xlu0 %520
    %v522 = vrcp.pop %v518
    %v523 = vrcp.pop %v521
    %v524 = vmul.f32 %v513, %v522
    %v525 = vmul.f32 %v515, %v523
    %s526 = scalar_lea.vmem %s65, 48
    %527 = vst.msk [vmem:[%s526] sm:$0xff] %vm291, %v524
    %528 = vst.msk [vmem:[%s526 + $0x8] sm:$0xff] %vm291, %v525
    %v529 = vpack.c.bf16 %v525, %v524
    %530 = vrot.lane.b32.xlu0 %v321, 104
    %v531 = vpop.permute.xlu0 %530
    %v534 = vsel %vm291, %v529, 0
    %536 = vmatpush.bf16.msra.mxu0 0
    %537 = vmatpush.bf16.msra.mxu0 0
    %538 = vmatpush.bf16.msra.mxu0 0
    %539 = vmatpush.bf16.msra.mxu0 0
    %540 = vmatpush.bf16.msra.mxu0 0
    %541 = vmatpush.bf16.msra.mxu0 0
    %542 = vmatpush.bf16.msra.mxu0 0
    %543 = vmatpush.bf16.msra.mxu0 %v531
    %544 = vmatmul.bf16.gmra.mxu0 %v534
    %v545 = vpop.f32.mrf.mxu0
    %v546 = vadd.f32 0.0, %v545
    %v547 = vpop.f32.mrf.mxu0
    %v548 = vadd.f32 0.0, %v547
    %549 = vdwg.mxu0
    %552 = vrot.lane.b32.xlu0 %v406, 8
    %v553 = vpop.permute.xlu0 %552
    %554 = vrot.lane.b32.xlu0 %v408, 8
    %v555 = vpop.permute.xlu0 %554
    %560 = vrot.lane.b32.xlu0 %v476, 16
    %v561 = vpop.permute.xlu0 %560
    %562 = vrot.lane.b32.xlu0 %v478, 16
    %v563 = vpop.permute.xlu0 %562
    %568 = vrot.lane.b32.xlu0 %v546, 24
    %v569 = vpop.permute.xlu0 %568
    %570 = vrot.lane.b32.xlu0 %v548, 24
    %v571 = vpop.permute.xlu0 %570
    %v574 = vsel %vm270, %v336, %v553
    %v575 = vsel %vm270, %v338, %v555
    %v576 = vsel %vm291, %v574, %v561
    %v577 = vsel %vm291, %v575, %v563
    %vm578 = vcmask 195584
    %v579 = vsel %vm578, %v576, %v569
    %v580 = vsel %vm578, %v577, %v571
    %v581 = vpack.c.bf16 %v580, %v579
    %v582 = vld [vmem:[%s23] sm:$0xf]
    %v583 = vld [vmem:[%s23 + $0x4] sm:$0xf]
    %v584 = vld [vmem:[%s23 + $0x8] sm:$0xf]
    %v585 = vld [vmem:[%s23 + $0xc] sm:$0xf]
    %v586 = vld [vmem:[%s25] sm:$0x1]
    %v588 = vperm.slane %v586, 0
    %v594 = vunpack.c.l.b16 %v582
    %v595 = vunpack.c.l.b16 %v583
    %v596 = vunpack.c.l.b16 %v584
    %v597 = vunpack.c.l.b16 %v585
    %v598 = vpack.c.b16 %v595, %v594
    %v599 = vpack.c.b16 %v597, %v596
    %v603 = vsel %vm166, %v581, 0
    %605 = vmatpush.bf16.msra.mxu0 0
    %606 = vmatpush.bf16.msra.mxu0 0
    %607 = vmatpush.bf16.msra.mxu0 0
    %608 = vmatpush.bf16.msra.mxu0 0
    %609 = vmatpush.bf16.msra.mxu0 0
    %610 = vmatpush.bf16.msra.mxu0 0
    %611 = vmatpush.bf16.msra.mxu0 %v599
    %612 = vmatpush.bf16.msra.mxu0 %v598
    %613 = vmatmul.bf16.gmra.mxu0 %v603
    %v614 = vpop.f32.mrf.mxu0
    %v615 = vadd.f32 %v588, %v614
    %v616 = vpop.f32.mrf.mxu0
    %v617 = vadd.f32 %v588, %v616
    %618 = vdwg.mxu0
    %v619 = vadd.f32 %v615, %v139
    %v620 = vadd.f32 %v617, %v140
    %v621 = vld [vmem:[%s27] sm:$0x1]
    %v622 = vld [vmem:[%s29] sm:$0x1]
    %v623 = vsel %vm166, %v619, 0.0
    %624 = vadd.xlane.f32.xlu0 %v623
    %v625 = vpop.xlane.xlu0 %624
    %v626 = vsel %vm166, %v620, 0.0
    %627 = vadd.xlane.f32.xlu0 %v626
    %v628 = vpop.xlane.xlu0 %627
    %v629 = vrcp.pop 32.0
    %v630 = vmul.f32 32.0, %v629
    %v631 = vsub.f32 1.0, %v630
    %v632 = vmul.f32 %v629, %v631
    %v633 = vadd.f32 %v629, %v632
    %vm634 = vweird.f32 %v629
    %v635 = vsel %vm634, %v629, %v633
    %v636 = vmul.f32 %v625, %v635
    %v637 = vmul.f32 %v628, %v635
    %v638 = vsub.f32 %v619, %v636
    %v639 = vsub.f32 %v620, %v637
    %v640 = vmul.f32 %v638, %v638
    %v641 = vmul.f32 %v639, %v639
    %v642 = vsel %vm166, %v640, 0.0
    %643 = vadd.xlane.f32.xlu0 %v642
    %v644 = vpop.xlane.xlu0 %643
    %v645 = vsel %vm166, %v641, 0.0
    %646 = vadd.xlane.f32.xlu0 %v645
    %v647 = vpop.xlane.xlu0 %646
    %v648 = vmul.f32 %v644, %v635
    %v649 = vmul.f32 %v647, %v635
    %v650 = vadd.f32 %v648, 1e-05
    %v651 = vadd.f32 %v649, 1e-05
    %v652 = vrsqrt.pop %v650
    %v653 = vmul.f32 %v652, %v650
    %v654 = vmul.f32 %v653, %v652
    %v655 = vmul.f32 0.5, %v654
    %v656 = vsub.f32 1.5, %v655
    %v657 = vmul.f32 %v652, %v656
    %vm658 = vweird.f32 %v650
    %vm659 = vweird.f32 %v652
    %vm660 = vmor %vm658, %vm659
    %v661 = vsel %vm660, %v652, %v657
    %v662 = vrsqrt.pop %v651
    %v663 = vmul.f32 %v662, %v651
    %v664 = vmul.f32 %v663, %v662
    %v665 = vmul.f32 0.5, %v664
    %v666 = vsub.f32 1.5, %v665
    %v667 = vmul.f32 %v662, %v666
    %vm668 = vweird.f32 %v651
    %vm669 = vweird.f32 %v662
    %vm670 = vmor %vm668, %vm669
    %v671 = vsel %vm670, %v662, %v667
    %v672 = vmul.f32 %v638, %v661
    %v673 = vmul.f32 %v639, %v671
    %v675 = vperm.slane %v621, 0
    %v677 = vmul.f32 %v672, %v675
    %v678 = vmul.f32 %v673, %v675
    %v680 = vperm.slane %v622, 0
    %v682 = vadd.f32 %v677, %v680
    %v683 = vadd.f32 %v678, %v680
    %685 = vset.pattern.permute.xlu0 0
    %686 = vperm.xlu0 %685, %v137
    %v687 = vpop.permute.xlu0 %686
    %690 = vset.pattern.permute.xlu0 0
    %691 = vperm.xlu0 %690, %v138
    %v692 = vpop.permute.xlu0 %691
    %v694 = vmul.f32 %v682, %v687
    %v695 = vmul.f32 %v683, %v692
    %v696 = vld [vmem:[%s9] sm:$0xff]
    %v697 = vld [vmem:[%s9 + $0x8] sm:$0xff]
    %v698 = vpack.c.bf16 %v695, %v694
    %v699 = vld [vmem:[%s31] sm:$0xf]
    %v700 = vld [vmem:[%s31 + $0x4] sm:$0xf]
    %v701 = vld [vmem:[%s31 + $0x8] sm:$0xf]
    %v702 = vld [vmem:[%s31 + $0xc] sm:$0xf]
    %v703 = vld [vmem:[%s33] sm:$0x1]
    %v705 = vperm.slane %v703, 0
    %v711 = vunpack.c.l.b16 %v699
    %v712 = vunpack.c.l.b16 %v700
    %v713 = vunpack.c.l.b16 %v701
    %v714 = vunpack.c.l.b16 %v702
    %v715 = vpack.c.b16 %v712, %v711
    %v716 = vpack.c.b16 %v714, %v713
    %v720 = vsel %vm166, %v698, 0
    %722 = vmatpush.bf16.msra.mxu0 0
    %723 = vmatpush.bf16.msra.mxu0 0
    %724 = vmatpush.bf16.msra.mxu0 0
    %725 = vmatpush.bf16.msra.mxu0 0
    %726 = vmatpush.bf16.msra.mxu0 0
    %727 = vmatpush.bf16.msra.mxu0 0
    %728 = vmatpush.bf16.msra.mxu0 %v716
    %729 = vmatpush.bf16.msra.mxu0 %v715
    %730 = vmatmul.bf16.gmra.mxu0 %v720
    %v731 = vpop.f32.mrf.mxu0
    %v732 = vadd.f32 %v705, %v731
    %v733 = vpop.f32.mrf.mxu0
    %v734 = vadd.f32 %v705, %v733
    %735 = vdwg.mxu0
    %v736 = vmul.f32 %v732, 0.35355338
    %v737 = vmul.f32 %v734, 0.35355338
    %v738 = vld [vmem:[%s35] sm:$0xf]
    %v739 = vld [vmem:[%s35 + $0x4] sm:$0xf]
    %v740 = vld [vmem:[%s35 + $0x8] sm:$0xf]
    %v741 = vld [vmem:[%s35 + $0xc] sm:$0xf]
    %v742 = vld [vmem:[%s37] sm:$0x1]
    %v744 = vperm.slane %v742, 0
    %v748 = vunpack.c.l.b16 %v141
    %v749 = vunpack.c.l.b16 %v142
    %v750 = vpack.c.b16 %v749, %v748
    %v755 = vunpack.c.l.b16 %v738
    %v756 = vunpack.c.l.b16 %v739
    %v757 = vunpack.c.l.b16 %v740
    %v758 = vunpack.c.l.b16 %v741
    %v759 = vpack.c.b16 %v756, %v755
    %v760 = vpack.c.b16 %v758, %v757
    %v764 = vsel %vm166, %v750, 0
    %766 = vmatpush.bf16.msra.mxu0 0
    %767 = vmatpush.bf16.msra.mxu0 0
    %768 = vmatpush.bf16.msra.mxu0 0
    %769 = vmatpush.bf16.msra.mxu0 0
    %770 = vmatpush.bf16.msra.mxu0 0
    %771 = vmatpush.bf16.msra.mxu0 0
    %772 = vmatpush.bf16.msra.mxu0 %v760
    %773 = vmatpush.bf16.msra.mxu0 %v759
    %774 = vmatmul.bf16.gmra.mxu0 %v764
    %v775 = vpop.f32.mrf.mxu0
    %v776 = vadd.f32 %v744, %v775
    %v777 = vpop.f32.mrf.mxu0
    %v778 = vadd.f32 %v744, %v777
    %779 = vdwg.mxu0
    %v780 = vld [vmem:[%s39] sm:$0xf]
    %v781 = vld [vmem:[%s39 + $0x4] sm:$0xf]
    %v782 = vld [vmem:[%s39 + $0x8] sm:$0xf]
    %v783 = vld [vmem:[%s39 + $0xc] sm:$0xf]
    %v784 = vld [vmem:[%s41] sm:$0x1]
    %v786 = vperm.slane %v784, 0
    %v792 = vunpack.c.l.b16 %v780
    %v793 = vunpack.c.l.b16 %v781
    %v794 = vunpack.c.l.b16 %v782
    %v795 = vunpack.c.l.b16 %v783
    %v796 = vpack.c.b16 %v793, %v792
    %v797 = vpack.c.b16 %v795, %v794
    %800 = vmatpush.bf16.msra.mxu0 0
    %801 = vmatpush.bf16.msra.mxu0 0
    %802 = vmatpush.bf16.msra.mxu0 0
    %803 = vmatpush.bf16.msra.mxu0 0
    %804 = vmatpush.bf16.msra.mxu0 0
    %805 = vmatpush.bf16.msra.mxu0 0
    %806 = vmatpush.bf16.msra.mxu0 %v797
    %807 = vmatpush.bf16.msra.mxu0 %v796
    %808 = vmatmul.bf16.gmra.mxu0 %v764
    %v809 = vpop.f32.mrf.mxu0
    %v810 = vadd.f32 %v786, %v809
    %v811 = vpop.f32.mrf.mxu0
    %v812 = vadd.f32 %v786, %v811
    %813 = vdwg.mxu0
    %v814 = vpack.c.bf16 %v736, %v736
    %v815 = vpack.c.bf16 %v737, %v737
    %v816 = vpack.c.bf16 %v776, %v776
    %v817 = vpack.c.bf16 %v778, %v778
    %v818 = vpack.c.bf16 %v810, %v810
    %v819 = vpack.c.bf16 %v812, %v812
    %v822 = vunpack.c.l.b16 %v814
    %v823 = vunpack.c.l.b16 %v815
    %v824 = vpack.c.b16 %v823, %v822
    %v827 = vunpack.c.l.b16 %v816
    %v828 = vunpack.c.l.b16 %v817
    %v829 = vpack.c.b16 %v828, %v827
    %v831 = vsel %vm270, %v824, 0
    %v834 = vsel %vm270, %v829, 0
    %836 = vmatpush.bf16.xpose.msra.mxu0 0
    %837 = vmatpush.bf16.xpose.msra.mxu0 0
    %838 = vmatpush.bf16.xpose.msra.mxu0 0
    %839 = vmatpush.bf16.xpose.msra.mxu0 0
    %840 = vmatpush.bf16.xpose.msra.mxu0 0
    %841 = vmatpush.bf16.xpose.msra.mxu0 0
    %842 = vmatpush.bf16.xpose.msra.mxu0 0
    %843 = vmatpush.bf16.xpose.msra.mxu0 %v834
    %844 = vmatmul.bf16.gmra.mxu0 %v831
    %v845 = vpop.f32.mrf.mxu0
    %v846 = vadd.f32 %v696, %v845
    %v847 = vpop.f32.mrf.mxu0
    %v848 = vadd.f32 %v697, %v847
    %849 = vdwg.mxu0
    %v850 = vsel %vm291, %v846, -inf
    %851 = vmax.xlane.f32.xlu0 %v850
    %v852 = vpop.xlane.xlu0 %851
    %v853 = vsel %vm291, %v848, -inf
    %854 = vmax.xlane.f32.xlu0 %v853
    %v855 = vpop.xlane.xlu0 %854
    %v856 = vsub.f32 %v846, %v852
    %v857 = vsub.f32 %v848, %v855
    %v858 = vmul.f32 %v856, 1.442695
    %v859 = vpow.pop %v858
    %v860 = vmul.f32 %v857, 1.442695
    %v861 = vpow.pop %v860
    %v862 = vsel %vm291, %v859, 0.0
    %863 = vadd.xlane.f32.xlu0 %v862
    %v864 = vpop.xlane.xlu0 %863
    %v865 = vsel %vm291, %v861, 0.0
    %866 = vadd.xlane.f32.xlu0 %v865
    %v867 = vpop.xlane.xlu0 %866
    %v868 = vrcp.pop %v864
    %v869 = vrcp.pop %v867
    %v870 = vmul.f32 %v859, %v868
    %v871 = vmul.f32 %v861, %v869
    %872 = vst.msk [vmem:[%s67] sm:$0xff] %vm291, %v870
    %873 = vst.msk [vmem:[%s67 + $0x8] sm:$0xff] %vm291, %v871
    %v874 = vpack.c.bf16 %v871, %v870
    %v877 = vunpack.c.l.b16 %v818
    %v878 = vunpack.c.l.b16 %v819
    %v879 = vpack.c.b16 %v878, %v877
    %v882 = vsel %vm291, %v874, 0
    %884 = vmatpush.bf16.msra.mxu0 0
    %885 = vmatpush.bf16.msra.mxu0 0
    %886 = vmatpush.bf16.msra.mxu0 0
    %887 = vmatpush.bf16.msra.mxu0 0
    %888 = vmatpush.bf16.msra.mxu0 0
    %889 = vmatpush.bf16.msra.mxu0 0
    %890 = vmatpush.bf16.msra.mxu0 0
    %891 = vmatpush.bf16.msra.mxu0 %v879
    %892 = vmatmul.bf16.gmra.mxu0 %v882
    %v893 = vpop.f32.mrf.mxu0
    %v894 = vadd.f32 0.0, %v893
    %v895 = vpop.f32.mrf.mxu0
    %v896 = vadd.f32 0.0, %v895
    %897 = vdwg.mxu0
    %898 = vrot.lane.b32.xlu0 %v824, 120
    %v899 = vpop.permute.xlu0 %898
    %900 = vrot.lane.b32.xlu0 %v829, 120
    %v901 = vpop.permute.xlu0 %900
    %v903 = vsel %vm270, %v899, 0
    %v906 = vsel %vm270, %v901, 0
    %908 = vmatpush.bf16.xpose.msra.mxu0 0
    %909 = vmatpush.bf16.xpose.msra.mxu0 0
    %910 = vmatpush.bf16.xpose.msra.mxu0 0
    %911 = vmatpush.bf16.xpose.msra.mxu0 0
    %912 = vmatpush.bf16.xpose.msra.mxu0 0
    %913 = vmatpush.bf16.xpose.msra.mxu0 0
    %914 = vmatpush.bf16.xpose.msra.mxu0 0
    %915 = vmatpush.bf16.xpose.msra.mxu0 %v906
    %916 = vmatmul.bf16.gmra.mxu0 %v903
    %v917 = vpop.f32.mrf.mxu0
    %v918 = vadd.f32 %v696, %v917
    %v919 = vpop.f32.mrf.mxu0
    %v920 = vadd.f32 %v697, %v919
    %921 = vdwg.mxu0
    %v922 = vsel %vm291, %v918, -inf
    %923 = vmax.xlane.f32.xlu0 %v922
    %v924 = vpop.xlane.xlu0 %923
    %v925 = vsel %vm291, %v920, -inf
    %926 = vmax.xlane.f32.xlu0 %v925
    %v927 = vpop.xlane.xlu0 %926
    %v928 = vsub.f32 %v918, %v924
    %v929 = vsub.f32 %v920, %v927
    %v930 = vmul.f32 %v928, 1.442695
    %v931 = vpow.pop %v930
    %v932 = vmul.f32 %v929, 1.442695
    %v933 = vpow.pop %v932
    %v934 = vsel %vm291, %v931, 0.0
    %935 = vadd.xlane.f32.xlu0 %v934
    %v936 = vpop.xlane.xlu0 %935
    %v937 = vsel %vm291, %v933, 0.0
    %938 = vadd.xlane.f32.xlu0 %v937
    %v939 = vpop.xlane.xlu0 %938
    %v940 = vrcp.pop %v936
    %v941 = vrcp.pop %v939
    %v942 = vmul.f32 %v931, %v940
    %v943 = vmul.f32 %v933, %v941
    %s944 = scalar_lea.vmem %s67, 16
    %945 = vst.msk [vmem:[%s944] sm:$0xff] %vm291, %v942
    %946 = vst.msk [vmem:[%s944 + $0x8] sm:$0xff] %vm291, %v943
    %v947 = vpack.c.bf16 %v943, %v942
    %948 = vrot.lane.b32.xlu0 %v879, 120
    %v949 = vpop.permute.xlu0 %948
    %v952 = vsel %vm291, %v947, 0
    %954 = vmatpush.bf16.msra.mxu0 0
    %955 = vmatpush.bf16.msra.mxu0 0
    %956 = vmatpush.bf16.msra.mxu0 0
    %957 = vmatpush.bf16.msra.mxu0 0
    %958 = vmatpush.bf16.msra.mxu0 0
    %959 = vmatpush.bf16.msra.mxu0 0
    %960 = vmatpush.bf16.msra.mxu0 0
    %961 = vmatpush.bf16.msra.mxu0 %v949
    %962 = vmatmul.bf16.gmra.mxu0 %v952
    %v963 = vpop.f32.mrf.mxu0
    %v964 = vadd.f32 0.0, %v963
    %v965 = vpop.f32.mrf.mxu0
    %v966 = vadd.f32 0.0, %v965
    %967 = vdwg.mxu0
    %968 = vrot.lane.b32.xlu0 %v824, 112
    %v969 = vpop.permute.xlu0 %968
    %970 = vrot.lane.b32.xlu0 %v829, 112
    %v971 = vpop.permute.xlu0 %970
    %v973 = vsel %vm270, %v969, 0
    %v976 = vsel %vm270, %v971, 0
    %978 = vmatpush.bf16.xpose.msra.mxu0 0
    %979 = vmatpush.bf16.xpose.msra.mxu0 0
    %980 = vmatpush.bf16.xpose.msra.mxu0 0
    %981 = vmatpush.bf16.xpose.msra.mxu0 0
    %982 = vmatpush.bf16.xpose.msra.mxu0 0
    %983 = vmatpush.bf16.xpose.msra.mxu0 0
    %984 = vmatpush.bf16.xpose.msra.mxu0 0
    %985 = vmatpush.bf16.xpose.msra.mxu0 %v976
    %986 = vmatmul.bf16.gmra.mxu0 %v973
    %v987 = vpop.f32.mrf.mxu0
    %v988 = vadd.f32 %v696, %v987
    %v989 = vpop.f32.mrf.mxu0
    %v990 = vadd.f32 %v697, %v989
    %991 = vdwg.mxu0
    %v992 = vsel %vm291, %v988, -inf
    %993 = vmax.xlane.f32.xlu0 %v992
    %v994 = vpop.xlane.xlu0 %993
    %v995 = vsel %vm291, %v990, -inf
    %996 = vmax.xlane.f32.xlu0 %v995
    %v997 = vpop.xlane.xlu0 %996
    %v998 = vsub.f32 %v988, %v994
    %v999 = vsub.f32 %v990, %v997
    %v1000 = vmul.f32 %v998, 1.442695
    %v1001 = vpow.pop %v1000
    %v1002 = vmul.f32 %v999, 1.442695
    %v1003 = vpow.pop %v1002
    %v1004 = vsel %vm291, %v1001, 0.0
    %1005 = vadd.xlane.f32.xlu0 %v1004
    %v1006 = vpop.xlane.xlu0 %1005
    %v1007 = vsel %vm291, %v1003, 0.0
    %1008 = vadd.xlane.f32.xlu0 %v1007
    %v1009 = vpop.xlane.xlu0 %1008
    %v1010 = vrcp.pop %v1006
    %v1011 = vrcp.pop %v1009
    %v1012 = vmul.f32 %v1001, %v1010
    %v1013 = vmul.f32 %v1003, %v1011
    %s1014 = scalar_lea.vmem %s67, 32
    %1015 = vst.msk [vmem:[%s1014] sm:$0xff] %vm291, %v1012
    %1016 = vst.msk [vmem:[%s1014 + $0x8] sm:$0xff] %vm291, %v1013
    %v1017 = vpack.c.bf16 %v1013, %v1012
    %1018 = vrot.lane.b32.xlu0 %v879, 112
    %v1019 = vpop.permute.xlu0 %1018
    %v1022 = vsel %vm291, %v1017, 0
    %1024 = vmatpush.bf16.msra.mxu0 0
    %1025 = vmatpush.bf16.msra.mxu0 0
    %1026 = vmatpush.bf16.msra.mxu0 0
    %1027 = vmatpush.bf16.msra.mxu0 0
    %1028 = vmatpush.bf16.msra.mxu0 0
    %1029 = vmatpush.bf16.msra.mxu0 0
    %1030 = vmatpush.bf16.msra.mxu0 0
    %1031 = vmatpush.bf16.msra.mxu0 %v1019
    %1032 = vmatmul.bf16.gmra.mxu0 %v1022
    %v1033 = vpop.f32.mrf.mxu0
    %v1034 = vadd.f32 0.0, %v1033
    %v1035 = vpop.f32.mrf.mxu0
    %v1036 = vadd.f32 0.0, %v1035
    %1037 = vdwg.mxu0
    %1038 = vrot.lane.b32.xlu0 %v824, 104
    %v1039 = vpop.permute.xlu0 %1038
    %1040 = vrot.lane.b32.xlu0 %v829, 104
    %v1041 = vpop.permute.xlu0 %1040
    %v1043 = vsel %vm270, %v1039, 0
    %v1046 = vsel %vm270, %v1041, 0
    %1048 = vmatpush.bf16.xpose.msra.mxu0 0
    %1049 = vmatpush.bf16.xpose.msra.mxu0 0
    %1050 = vmatpush.bf16.xpose.msra.mxu0 0
    %1051 = vmatpush.bf16.xpose.msra.mxu0 0
    %1052 = vmatpush.bf16.xpose.msra.mxu0 0
    %1053 = vmatpush.bf16.xpose.msra.mxu0 0
    %1054 = vmatpush.bf16.xpose.msra.mxu0 0
    %1055 = vmatpush.bf16.xpose.msra.mxu0 %v1046
    %1056 = vmatmul.bf16.gmra.mxu0 %v1043
    %v1057 = vpop.f32.mrf.mxu0
    %v1058 = vadd.f32 %v696, %v1057
    %v1059 = vpop.f32.mrf.mxu0
    %v1060 = vadd.f32 %v697, %v1059
    %1061 = vdwg.mxu0
    %v1062 = vsel %vm291, %v1058, -inf
    %1063 = vmax.xlane.f32.xlu0 %v1062
    %v1064 = vpop.xlane.xlu0 %1063
    %v1065 = vsel %vm291, %v1060, -inf
    %1066 = vmax.xlane.f32.xlu0 %v1065
    %v1067 = vpop.xlane.xlu0 %1066
    %v1068 = vsub.f32 %v1058, %v1064
    %v1069 = vsub.f32 %v1060, %v1067
    %v1070 = vmul.f32 %v1068, 1.442695
    %v1071 = vpow.pop %v1070
    %v1072 = vmul.f32 %v1069, 1.442695
    %v1073 = vpow.pop %v1072
    %v1074 = vsel %vm291, %v1071, 0.0
    %1075 = vadd.xlane.f32.xlu0 %v1074
    %v1076 = vpop.xlane.xlu0 %1075
    %v1077 = vsel %vm291, %v1073, 0.0
    %1078 = vadd.xlane.f32.xlu0 %v1077
    %v1079 = vpop.xlane.xlu0 %1078
    %v1080 = vrcp.pop %v1076
    %v1081 = vrcp.pop %v1079
    %v1082 = vmul.f32 %v1071, %v1080
    %v1083 = vmul.f32 %v1073, %v1081
    %s1084 = scalar_lea.vmem %s67, 48
    %1085 = vst.msk [vmem:[%s1084] sm:$0xff] %vm291, %v1082
    %1086 = vst.msk [vmem:[%s1084 + $0x8] sm:$0xff] %vm291, %v1083
    %v1087 = vpack.c.bf16 %v1083, %v1082
    %1088 = vrot.lane.b32.xlu0 %v879, 104
    %v1089 = vpop.permute.xlu0 %1088
    %v1092 = vsel %vm291, %v1087, 0
    %1094 = vmatpush.bf16.msra.mxu0 0
    %1095 = vmatpush.bf16.msra.mxu0 0
    %1096 = vmatpush.bf16.msra.mxu0 0
    %1097 = vmatpush.bf16.msra.mxu0 0
    %1098 = vmatpush.bf16.msra.mxu0 0
    %1099 = vmatpush.bf16.msra.mxu0 0
    %1100 = vmatpush.bf16.msra.mxu0 0
    %1101 = vmatpush.bf16.msra.mxu0 %v1089
    %1102 = vmatmul.bf16.gmra.mxu0 %v1092
    %v1103 = vpop.f32.mrf.mxu0
    %v1104 = vadd.f32 0.0, %v1103
    %v1105 = vpop.f32.mrf.mxu0
    %v1106 = vadd.f32 0.0, %v1105
    %1107 = vdwg.mxu0
    %1110 = vrot.lane.b32.xlu0 %v964, 8
    %v1111 = vpop.permute.xlu0 %1110
    %1112 = vrot.lane.b32.xlu0 %v966, 8
    %v1113 = vpop.permute.xlu0 %1112
    %1118 = vrot.lane.b32.xlu0 %v1034, 16
    %v1119 = vpop.permute.xlu0 %1118
    %1120 = vrot.lane.b32.xlu0 %v1036, 16
    %v1121 = vpop.permute.xlu0 %1120
    %1126 = vrot.lane.b32.xlu0 %v1104, 24
    %v1127 = vpop.permute.xlu0 %1126
    %1128 = vrot.lane.b32.xlu0 %v1106, 24
    %v1129 = vpop.permute.xlu0 %1128
    %v1132 = vsel %vm270, %v894, %v1111
    %v1133 = vsel %vm270, %v896, %v1113
    %v1134 = vsel %vm291, %v1132, %v1119
    %v1135 = vsel %vm291, %v1133, %v1121
    %v1136 = vsel %vm578, %v1134, %v1127
    %v1137 = vsel %vm578, %v1135, %v1129
    %v1138 = vpack.c.bf16 %v1137, %v1136
    %v1139 = vld [vmem:[%s43] sm:$0xf]
    %v1140 = vld [vmem:[%s43 + $0x4] sm:$0xf]
    %v1141 = vld [vmem:[%s43 + $0x8] sm:$0xf]
    %v1142 = vld [vmem:[%s43 + $0xc] sm:$0xf]
    %v1143 = vld [vmem:[%s45] sm:$0x1]
    %v1145 = vperm.slane %v1143, 0
    %v1151 = vunpack.c.l.b16 %v1139
    %v1152 = vunpack.c.l.b16 %v1140
    %v1153 = vunpack.c.l.b16 %v1141
    %v1154 = vunpack.c.l.b16 %v1142
    %v1155 = vpack.c.b16 %v1152, %v1151
    %v1156 = vpack.c.b16 %v1154, %v1153
    %v1160 = vsel %vm166, %v1138, 0
    %1162 = vmatpush.bf16.msra.mxu0 0
    %1163 = vmatpush.bf16.msra.mxu0 0
    %1164 = vmatpush.bf16.msra.mxu0 0
    %1165 = vmatpush.bf16.msra.mxu0 0
    %1166 = vmatpush.bf16.msra.mxu0 0
    %1167 = vmatpush.bf16.msra.mxu0 0
    %1168 = vmatpush.bf16.msra.mxu0 %v1156
    %1169 = vmatpush.bf16.msra.mxu0 %v1155
    %1170 = vmatmul.bf16.gmra.mxu0 %v1160
    %v1171 = vpop.f32.mrf.mxu0
    %v1172 = vadd.f32 %v1145, %v1171
    %v1173 = vpop.f32.mrf.mxu0
    %v1174 = vadd.f32 %v1145, %v1173
    %1175 = vdwg.mxu0
    %v1176 = vadd.f32 %v1172, %v694
    %v1177 = vadd.f32 %v1174, %v695
    %v1178 = vld [vmem:[%s47] sm:$0x1]
    %v1179 = vld [vmem:[%s49] sm:$0x1]
    %v1180 = vsel %vm166, %v1176, 0.0
    %1181 = vadd.xlane.f32.xlu0 %v1180
    %v1182 = vpop.xlane.xlu0 %1181
    %v1183 = vsel %vm166, %v1177, 0.0
    %1184 = vadd.xlane.f32.xlu0 %v1183
    %v1185 = vpop.xlane.xlu0 %1184
    %v1186 = vmul.f32 %v1182, %v635
    %v1187 = vmul.f32 %v1185, %v635
    %v1188 = vsub.f32 %v1176, %v1186
    %v1189 = vsub.f32 %v1177, %v1187
    %v1190 = vmul.f32 %v1188, %v1188
    %v1191 = vmul.f32 %v1189, %v1189
    %v1192 = vsel %vm166, %v1190, 0.0
    %1193 = vadd.xlane.f32.xlu0 %v1192
    %v1194 = vpop.xlane.xlu0 %1193
    %v1195 = vsel %vm166, %v1191, 0.0
    %1196 = vadd.xlane.f32.xlu0 %v1195
    %v1197 = vpop.xlane.xlu0 %1196
    %v1198 = vmul.f32 %v1194, %v635
    %v1199 = vmul.f32 %v1197, %v635
    %v1200 = vadd.f32 %v1198, 1e-05
    %v1201 = vadd.f32 %v1199, 1e-05
    %v1202 = vrsqrt.pop %v1200
    %v1203 = vmul.f32 %v1202, %v1200
    %v1204 = vmul.f32 %v1203, %v1202
    %v1205 = vmul.f32 0.5, %v1204
    %v1206 = vsub.f32 1.5, %v1205
    %v1207 = vmul.f32 %v1202, %v1206
    %vm1208 = vweird.f32 %v1200
    %vm1209 = vweird.f32 %v1202
    %vm1210 = vmor %vm1208, %vm1209
    %v1211 = vsel %vm1210, %v1202, %v1207
    %v1212 = vrsqrt.pop %v1201
    %v1213 = vmul.f32 %v1212, %v1201
    %v1214 = vmul.f32 %v1213, %v1212
    %v1215 = vmul.f32 0.5, %v1214
    %v1216 = vsub.f32 1.5, %v1215
    %v1217 = vmul.f32 %v1212, %v1216
    %vm1218 = vweird.f32 %v1201
    %vm1219 = vweird.f32 %v1212
    %vm1220 = vmor %vm1218, %vm1219
    %v1221 = vsel %vm1220, %v1212, %v1217
    %v1222 = vmul.f32 %v1188, %v1211
    %v1223 = vmul.f32 %v1189, %v1221
    %v1225 = vperm.slane %v1178, 0
    %v1227 = vmul.f32 %v1222, %v1225
    %v1228 = vmul.f32 %v1223, %v1225
    %v1230 = vperm.slane %v1179, 0
    %v1232 = vadd.f32 %v1227, %v1230
    %v1233 = vadd.f32 %v1228, %v1230
    %v1234 = vmul.f32 %v1232, %v687
    %v1235 = vmul.f32 %v1233, %v692
    %v1236 = vpack.c.bf16 %v1235, %v1234
    %v1237 = vld [vmem:[%s51] sm:$0xf]
    %v1238 = vld [vmem:[%s51 + $0x4] sm:$0xf]
    %v1239 = vld [vmem:[%s51 + $0x8] sm:$0xf]
    %v1240 = vld [vmem:[%s51 + $0xc] sm:$0xf]
    %v1241 = vld [vmem:[%s53] sm:$0x1]
    %v1243 = vperm.slane %v1241, 0
    %v1249 = vunpack.c.l.b16 %v1237
    %v1250 = vunpack.c.l.b16 %v1238
    %v1251 = vunpack.c.l.b16 %v1239
    %v1252 = vunpack.c.l.b16 %v1240
    %v1253 = vpack.c.b16 %v1250, %v1249
    %v1254 = vpack.c.b16 %v1252, %v1251
    %v1258 = vsel %vm166, %v1236, 0
    %1260 = vmatpush.bf16.msra.mxu0 0
    %1261 = vmatpush.bf16.msra.mxu0 0
    %1262 = vmatpush.bf16.msra.mxu0 0
    %1263 = vmatpush.bf16.msra.mxu0 0
    %1264 = vmatpush.bf16.msra.mxu0 0
    %1265 = vmatpush.bf16.msra.mxu0 0
    %1266 = vmatpush.bf16.msra.mxu0 %v1254
    %1267 = vmatpush.bf16.msra.mxu0 %v1253
    %1268 = vmatmul.bf16.gmra.mxu0 %v1258
    %v1269 = vpop.f32.mrf.mxu0
    %v1270 = vadd.f32 %v1243, %v1269
    %v1271 = vpop.f32.mrf.mxu0
    %v1272 = vadd.f32 %v1243, %v1271
    %1273 = vdwg.mxu0
    %v1274 = vmax.f32 %v1270, 0.0
    %v1275 = vmax.f32 %v1272, 0.0
    %v1276 = vpack.c.bf16 %v1275, %v1274
    %v1277 = vld [vmem:[%s55] sm:$0xf]
    %v1278 = vld [vmem:[%s55 + $0x4] sm:$0xf]
    %v1279 = vld [vmem:[%s55 + $0x8] sm:$0xf]
    %v1280 = vld [vmem:[%s55 + $0xc] sm:$0xf]
    %v1281 = vld [vmem:[%s55 + $0x10] sm:$0xf]
    %v1282 = vld [vmem:[%s55 + $0x14] sm:$0xf]
    %v1283 = vld [vmem:[%s55 + $0x18] sm:$0xf]
    %v1284 = vld [vmem:[%s55 + $0x1c] sm:$0xf]
    %v1285 = vld [vmem:[%s57] sm:$0x1]
    %v1287 = vperm.slane %v1285, 0
    %v1297 = vunpack.c.l.b16 %v1277
    %v1298 = vunpack.c.l.b16 %v1278
    %v1299 = vunpack.c.l.b16 %v1279
    %v1300 = vunpack.c.l.b16 %v1280
    %v1301 = vunpack.c.l.b16 %v1281
    %v1302 = vunpack.c.l.b16 %v1282
    %v1303 = vunpack.c.l.b16 %v1283
    %v1304 = vunpack.c.l.b16 %v1284
    %v1305 = vpack.c.b16 %v1298, %v1297
    %v1306 = vpack.c.b16 %v1300, %v1299
    %v1307 = vpack.c.b16 %v1302, %v1301
    %v1308 = vpack.c.b16 %v1304, %v1303
    %vm1313 = vcmask 523264
    %v1315 = vsel %vm1313, %v1276, 0
    %1317 = vmatpush.bf16.msra.mxu0 0
    %1318 = vmatpush.bf16.msra.mxu0 0
    %1319 = vmatpush.bf16.msra.mxu0 0
    %1320 = vmatpush.bf16.msra.mxu0 0
    %1321 = vmatpush.bf16.msra.mxu0 %v1308
    %1322 = vmatpush.bf16.msra.mxu0 %v1307
    %1323 = vmatpush.bf16.msra.mxu0 %v1306
    %1324 = vmatpush.bf16.msra.mxu0 %v1305
    %1325 = vmatmul.bf16.gmra.mxu0 %v1315
    %v1326 = vpop.f32.mrf.mxu0
    %v1327 = vadd.f32 %v1287, %v1326
    %v1328 = vpop.f32.mrf.mxu0
    %v1329 = vadd.f32 %v1287, %v1328
    %1330 = vdwg.mxu0
    %v1331 = vadd.f32 %v1327, %v1234
    %v1332 = vadd.f32 %v1329, %v1235
    %v1333 = vld [vmem:[%s59] sm:$0x1]
    %v1334 = vld [vmem:[%s61] sm:$0x1]
    %v1335 = vsel %vm166, %v1331, 0.0
    %1336 = vadd.xlane.f32.xlu0 %v1335
    %v1337 = vpop.xlane.xlu0 %1336
    %v1338 = vsel %vm166, %v1332, 0.0
    %1339 = vadd.xlane.f32.xlu0 %v1338
    %v1340 = vpop.xlane.xlu0 %1339
    %v1341 = vmul.f32 %v1337, %v635
    %v1342 = vmul.f32 %v1340, %v635
    %v1343 = vsub.f32 %v1331, %v1341
    %v1344 = vsub.f32 %v1332, %v1342
    %v1345 = vmul.f32 %v1343, %v1343
    %v1346 = vmul.f32 %v1344, %v1344
    %v1347 = vsel %vm166, %v1345, 0.0
    %1348 = vadd.xlane.f32.xlu0 %v1347
    %v1349 = vpop.xlane.xlu0 %1348
    %v1350 = vsel %vm166, %v1346, 0.0
    %1351 = vadd.xlane.f32.xlu0 %v1350
    %v1352 = vpop.xlane.xlu0 %1351
    %v1353 = vmul.f32 %v1349, %v635
    %v1354 = vmul.f32 %v1352, %v635
    %v1355 = vadd.f32 %v1353, 1e-05
    %v1356 = vadd.f32 %v1354, 1e-05
    %v1357 = vrsqrt.pop %v1355
    %v1358 = vmul.f32 %v1357, %v1355
    %v1359 = vmul.f32 %v1358, %v1357
    %v1360 = vmul.f32 0.5, %v1359
    %v1361 = vsub.f32 1.5, %v1360
    %v1362 = vmul.f32 %v1357, %v1361
    %vm1363 = vweird.f32 %v1355
    %vm1364 = vweird.f32 %v1357
    %vm1365 = vmor %vm1363, %vm1364
    %v1366 = vsel %vm1365, %v1357, %v1362
    %v1367 = vrsqrt.pop %v1356
    %v1368 = vmul.f32 %v1367, %v1356
    %v1369 = vmul.f32 %v1368, %v1367
    %v1370 = vmul.f32 0.5, %v1369
    %v1371 = vsub.f32 1.5, %v1370
    %v1372 = vmul.f32 %v1367, %v1371
    %vm1373 = vweird.f32 %v1356
    %vm1374 = vweird.f32 %v1367
    %vm1375 = vmor %vm1373, %vm1374
    %v1376 = vsel %vm1375, %v1367, %v1372
    %v1377 = vmul.f32 %v1343, %v1366
    %v1378 = vmul.f32 %v1344, %v1376
    %v1380 = vperm.slane %v1333, 0
    %v1382 = vmul.f32 %v1377, %v1380
    %v1383 = vmul.f32 %v1378, %v1380
    %v1385 = vperm.slane %v1334, 0
    %v1387 = vadd.f32 %v1382, %v1385
    %v1388 = vadd.f32 %v1383, %v1385
    %v1389 = vmul.f32 %v1387, %v687
    %v1390 = vmul.f32 %v1388, %v692
    %1391 = vst.msk [vmem:[#allocation2] sm:$0xff] %vm166, %v1389
    %1392 = vst.msk [vmem:[#allocation2 + $0x8] sm:$0xff] %vm166, %v1390
    // Predicated region
    $region126: #{decoder_layer_forward.1} parent=1 // pred_check
      _
    $region127: #{decoder_layer_forward.1} parent=1 // pred_check_branch
      %1394 = sbr.rel (0) target = $region129
    $region128: #{decoder_layer_forward.1} parent=1 // pred_region
      %1396 = vsyncadd [#allocation3], 0
      %s1397 = sshll.u32 [#allocation2], 4
      %s1398 = int_to_ptr.vmem [resolvable:$true] %s1397
      %s1399 = sshll.u32 %s63, 4
      %s1400 = int_to_ptr.hbm [resolvable:$true] %s1399
      %1405 = dma.vmem_to_hbm [thread:$0]  %s1398, 256, %s1400, [#allocation3], 128, 128, 8
    $region129: #{decoder_layer_forward.1} parent=1 // pred_fallthru
      _
    // Predicated region
    $region130: #{decoder_layer_forward.1} parent=1 // pred_check
      _
    $region131: #{decoder_layer_forward.1} parent=1 // pred_check_branch
      %1407 = sbr.rel (0) target = $region133
    $region132: #{decoder_layer_forward.1} parent=1 // pred_region
      _
    $region133: #{decoder_layer_forward.1} parent=1 // pred_fallthru
      _
    // Predicated region
    $region134: #{decoder_layer_forward.1} parent=1 // pred_check
      _
    $region135: #{decoder_layer_forward.1} parent=1 // pred_check_branch
      %1409 = sbr.rel (0) target = $region137
    $region136: #{decoder_layer_forward.1} parent=1 // pred_region
      _
    $region137: #{decoder_layer_forward.1} parent=1 // pred_fallthru
      _
    // Predicated region
    $region138: #{decoder_layer_forward.1} parent=1 // pred_check
      _
    $region139: #{decoder_layer_forward.1} parent=1 // pred_check_branch
      %1411 = sbr.rel (0) target = $region141
    $region140: #{decoder_layer_forward.1} parent=1 // pred_region
      %1413 = dma.done [#allocation3], 256
    $region141: #{decoder_layer_forward.1} parent=1 // pred_fallthru
      _
    // Predicated region
    $region142: #{decoder_layer_forward.1} parent=1 // pred_check
      _
    $region143: #{decoder_layer_forward.1} parent=1 // pred_check_branch
      %1415 = sbr.rel (0) target = $region145
    $region144: #{decoder_layer_forward.1} parent=1 // pred_region
      _
    $region145: #{decoder_layer_forward.1} parent=1 // pred_fallthru
      _
    // Predicated region
    $region146: #{decoder_layer_forward.1} parent=1 // pred_check
      _
    $region147: #{decoder_layer_forward.1} parent=1 // pred_check_branch
      %1417 = sbr.rel (0) target = $region149
    $region148: #{decoder_layer_forward.1} parent=1 // pred_region
      _
    $region149: #{decoder_layer_forward.1} parent=1 // pred_fallthru
      _
    %1418 = vsyncpa [#allocation3], 1

</llo_original>
